<compile_context>
chip_gen: v7x
topology: tpu7x:2x2x1
jax: 0.10.0
libtpu: 0.0.40
codegen_flags: <defaults>
</compile_context>

<pallas_src>
import functools

import jax
import jax.numpy as jnp
from jax import lax
from jax.experimental import pallas as pl
from jax.experimental.pallas import tpu as pltpu


def _pool_conv_kernel(x_ref, w_ref, b_ref, o_ref, *, pool_mode):
    # x_ref: (Cin, tho, 2*W)  -- for output row t, lanes [0:W) are image row 2t and
    #                            lanes [W:2W) are image row 2t+1 (fused by the wrapper
    #                            reshape; no strided views needed).
    # w_ref: (Cout, Cin) 1x1-conv weight (already scaled by 0.25 for 'Avg').
    # b_ref: (Cout, 1)   bias.
    # o_ref: (Cout, tho, Wo) output block (native NCHW).
    cin, tho, two_w = x_ref.shape
    w = two_w // 2
    wo = w // 2

    x = x_ref[...].astype(jnp.float32)          # (Cin, tho, 2W)
    top = x[:, :, :w]                           # image rows 2t
    bot = x[:, :, w:]                           # image rows 2t+1

    if pool_mode == "Avg":
        rowp = top + bot                        # vertical pair-sum (scale folded into weight)
    elif pool_mode == "Max":
        rowp = jnp.maximum(top, bot)            # vertical pair-max
    else:
        # TODO(synk): mode=None in the PyTorch module has no self.pool and forward would
        # raise; only 'Avg' / 'Max' are supported here.
        raise ValueError("pool_mode must be 'Avg' or 'Max'")

    # Merge (Cin, tho) -> rows so the horizontal compaction is ONE wide matmul
    # (spatial on the MXU's wide axis).  Leading-dim merge: layout-friendly.
    rowp2 = rowp.reshape(cin * tho, w)          # (Cin*tho, W)

    # Selection matrices that pick/accumulate the horizontal lane pair (w -> wo).
    widx = lax.broadcasted_iota(jnp.int32, (w, wo), 0)
    jidx = lax.broadcasted_iota(jnp.int32, (w, wo), 1)
    if pool_mode == "Avg":
        # column j sums lanes 2j and 2j+1
        sel = jnp.logical_or(widx == 2 * jidx, widx == 2 * jidx + 1).astype(jnp.float32)
        pooled2 = jnp.dot(rowp2, sel, preferred_element_type=jnp.float32)      # (Cin*tho, Wo)
    else:
        sel_e = (widx == 2 * jidx).astype(jnp.float32)
        sel_o = (widx == 2 * jidx + 1).astype(jnp.float32)
        pooled2 = jnp.maximum(
            jnp.dot(rowp2, sel_e, preferred_element_type=jnp.float32),
            jnp.dot(rowp2, sel_o, preferred_element_type=jnp.float32))          # (Cin*tho, Wo)

    pooled = pooled2.reshape(cin, tho, wo)       # leading-dim split

    wmat = w_ref[...].astype(jnp.float32)        # (Cout, Cin)
    bvec = b_ref[...].astype(jnp.float32)        # (Cout, 1)

    # 1x1 conv per output row of the tile: (Cout, Cin) @ (Cin, Wo), spatial on lanes.
    # tho <= 8, so this static unroll stays small.
    for t in range(tho):
        y = jnp.dot(wmat, pooled[:, t, :], preferred_element_type=jnp.float32) + bvec
        o_ref[:, t, :] = y.astype(o_ref.dtype)


def _choose_row_tile(ho, cin, cout, w2, budget_bytes=4 * 1024 * 1024):
    """Pick tho dividing Ho with tho % 8 == 0 (or tho == Ho), largest that fits budget."""
    per_row = 4 * (cin * 2 * w2 + cout * (w2 // 2))     # input + output bytes per out-row
    cands = sorted({d for d in range(8, ho + 1, 8) if ho % d == 0} | {ho})
    best = cands[0]
    for d in cands:
        if d * per_row <= budget_bytes:
            best = d
    return best


def pool_forward(x_nchw, weight, bias, mode):
    """Pool module forward.

    x_nchw: (N, Cin, H, W) float32
    weight: (Cout, Cin, 1, 1) float32   (PyTorch Conv2d layout)
    bias:   (Cout,) float32
    mode:   'Avg' or 'Max'
    returns (N, Cout, H//2, W//2) float32
    """
    if mode not in ("Avg", "Max"):
        # TODO(synk): mode=None has no pooling layer in the PyTorch module (forward raises).
        raise ValueError("mode must be 'Avg' or 'Max'")

    n, cin, h, w = x_nchw.shape
    cout = weight.shape[0]
    ho, wo = h // 2, w // 2
    if h != 2 * ho or w != 2 * wo:
        # PyTorch k=2,s=2,p=0 pooling silently drops a trailing odd row/col.
        x_nchw = x_nchw[:, :, : 2 * ho, : 2 * wo]
    w2 = 2 * wo                                           # (possibly truncated) width

    # Free, layout-preserving reshape: fuse each vertical row pair onto the lane axis.
    x_r = x_nchw.reshape(n, cin, ho, 2 * w2)              # (N, Cin, Ho, 2W)

    w_mat = weight.reshape(cout, cin).astype(jnp.float32)
    if mode == "Avg":
        w_mat = w_mat * 0.25                              # fold the /4 of avg-pool into the conv
    b_mat = bias.reshape(cout, 1).astype(jnp.float32)

    tho = _choose_row_tile(ho, cin, cout, w2)
    grid = (n, ho // tho)

    out = pl.pallas_call(
        functools.partial(_pool_conv_kernel, pool_mode=mode),
        out_shape=jax.ShapeDtypeStruct((n, cout, ho, wo), x_nchw.dtype),
        grid_spec=pltpu.PrefetchScalarGridSpec(
            num_scalar_prefetch=0,
            grid=grid,
            in_specs=[
                pl.BlockSpec((None, cin, tho, 2 * w2), lambda nn, i: (nn, 0, i, 0)),
                pl.BlockSpec((cout, cin), lambda nn, i: (0, 0)),
                pl.BlockSpec((cout, 1), lambda nn, i: (0, 0)),
            ],
            out_specs=pl.BlockSpec((None, cout, tho, wo), lambda nn, i: (nn, 0, i, 0)),
        ),
        compiler_params=pltpu.CompilerParams(
            dimension_semantics=("parallel", "parallel"),
            vmem_limit_bytes=32 * 1024 * 1024,
        ),
    )(x_r, w_mat, b_mat)

    return out                                            # already NCHW


def pool_reference(x_nchw, weight, bias, mode):
    """Pure-JAX reference mirroring the PyTorch module."""
    n, cin, h, w = x_nchw.shape
    ho, wo = h // 2, w // 2
    x = x_nchw[:, :, : 2 * ho, : 2 * wo]
    xr = x.reshape(n, cin, ho, 2, wo, 2)
    if mode == "Avg":
        pooled = xr.mean(axis=(3, 5))
    else:
        pooled = xr.max(axis=(3, 5))
    w_mat = weight.reshape(weight.shape[0], cin)          # (Cout, Cin)
    return jnp.einsum("nchw,oc->nohw", pooled, w_mat) + bias[None, :, None, None]


if __name__ == "__main__":
    key = jax.random.PRNGKey(0)
    kx, kw, kb = jax.random.split(key, 3)

    N, C_IN, C_OUT, H, W = 2, 4, 8, 16, 16
    x = jax.random.normal(kx, (N, C_IN, H, W), dtype=jnp.float32)
    weight = jax.random.normal(kw, (C_OUT, C_IN, 1, 1), dtype=jnp.float32) * 0.1
    bias = jax.random.normal(kb, (C_OUT,), dtype=jnp.float32) * 0.1

    ok = True
    for mode in ("Avg", "Max"):
        out = jax.block_until_ready(pool_forward(x, weight, bias, mode))
        ref = pool_reference(x, weight, bias, mode)
        if out.shape != (N, C_OUT, H // 2, W // 2):
            ok = False
        if not jnp.allclose(out, ref, atol=1e-4, rtol=1e-4):
            ok = False

    if ok:
        print("KERNEL_OK")
</pallas_src>

<mosaic_0001>
module attributes {stable_mosaic.version = 11 : i64} {
  func.func @_pool_conv_kernel(%arg0: i32, %arg1: i32, %arg2: memref<1x4x8x32xf32, #tpu.memory_space<vmem>>, %arg3: memref<8x4xf32, #tpu.memory_space<vmem>>, %arg4: memref<8x1xf32, #tpu.memory_space<vmem>>, %arg5: memref<1x8x8x8xf32, #tpu.memory_space<vmem>>) attributes {dimension_semantics = [#tpu.dimension_semantics<parallel>, #tpu.dimension_semantics<parallel>], iteration_bounds = array<i64: 2, 1>, scalar_prefetch = 0 : i64, scratch_operands = 0 : i64, tpu.core_type = #tpu.core_type<tc>, window_params = [{transform_indices = @transform_0, window_bounds = array<i64: 1, 4, 8, 32>}, {pipeline_mode = #tpu.pipeline_mode<synchronous>, transform_indices = @transform_1, window_bounds = array<i64: 8, 4>}, {pipeline_mode = #tpu.pipeline_mode<synchronous>, transform_indices = @transform_2, window_bounds = array<i64: 8, 1>}, {transform_indices = @transform_3, window_bounds = array<i64: 1, 8, 8, 8>}]} {
    %c0 = arith.constant 0 : index
    %c0_0 = arith.constant 0 : index
    %c0_1 = arith.constant 0 : index
    %c0_2 = arith.constant 0 : index
    %0 = vector.load %arg2[%c0, %c0_0, %c0_1, %c0_2] : memref<1x4x8x32xf32, #tpu.memory_space<vmem>>, vector<1x4x8x32xf32>
    %1 = vector.shape_cast %0 : vector<1x4x8x32xf32> to vector<4x8x32xf32>
    %2 = vector.extract_strided_slice %1 {offsets = [0, 0, 0], sizes = [4, 8, 16], strides = [1, 1, 1]} : vector<4x8x32xf32> to vector<4x8x16xf32>
    %3 = vector.extract_strided_slice %1 {offsets = [0, 0, 16], sizes = [4, 8, 16], strides = [1, 1, 1]} : vector<4x8x32xf32> to vector<4x8x16xf32>
    %4 = arith.addf %2, %3 : vector<4x8x16xf32>
    %5 = vector.shape_cast %4 : vector<4x8x16xf32> to vector<32x16xf32>
    %6 = tpu.iota {dimensions = array<i32: 0>} : vector<16x8xi32>
    %7 = tpu.iota {dimensions = array<i32: 1>} : vector<16x8xi32>
    %c2_i32 = arith.constant 2 : i32
    %8 = vector.broadcast %c2_i32 : i32 to vector<16x8xi32>
    %9 = arith.muli %8, %7 : vector<16x8xi32>
    %10 = arith.cmpi eq, %6, %9 : vector<16x8xi32>
    %c2_i32_3 = arith.constant 2 : i32
    %11 = vector.broadcast %c2_i32_3 : i32 to vector<16x8xi32>
    %12 = arith.muli %11, %7 : vector<16x8xi32>
    %c1_i32 = arith.constant 1 : i32
    %13 = vector.broadcast %c1_i32 : i32 to vector<16x8xi32>
    %14 = arith.addi %12, %13 : vector<16x8xi32>
    %15 = arith.cmpi eq, %6, %14 : vector<16x8xi32>
    %16 = arith.ori %10, %15 : vector<16x8xi1>
    %17 = arith.extui %16 : vector<16x8xi1> to vector<16x8xi32>
    %18 = arith.sitofp %17 : vector<16x8xi32> to vector<16x8xf32>
    %cst = arith.constant dense<0.000000e+00> : vector<32x8xf32>
    %19 = tpu.matmul %5, %18, %cst {dimension_numbers = #tpu.dot_dimension_numbers<[1], [0], [0], [1], [0, 0, 1, 1], [], []>} : vector<32x16xf32>, vector<16x8xf32>, vector<32x8xf32> -> vector<32x8xf32>
    %20 = vector.shape_cast %19 : vector<32x8xf32> to vector<4x8x8xf32>
    %c0_4 = arith.constant 0 : index
    %c0_5 = arith.constant 0 : index
    %21 = vector.load %arg3[%c0_4, %c0_5] : memref<8x4xf32, #tpu.memory_space<vmem>>, vector<8x4xf32>
    %c0_6 = arith.constant 0 : index
    %c0_7 = arith.constant 0 : index
    %22 = vector.load %arg4[%c0_6, %c0_7] : memref<8x1xf32, #tpu.memory_space<vmem>>, vector<8x1xf32>
    %23 = vector.extract_strided_slice %20 {offsets = [0, 0, 0], sizes = [4, 1, 8], strides = [1, 1, 1]} : vector<4x8x8xf32> to vector<4x1x8xf32>
    %24 = vector.shape_cast %23 : vector<4x1x8xf32> to vector<4x8xf32>
    %cst_8 = arith.constant dense<0.000000e+00> : vector<8x8xf32>
    %25 = tpu.matmul %21, %24, %cst_8 {dimension_numbers = #tpu.dot_dimension_numbers<[1], [0], [0], [1], [0, 0, 1, 1], [], []>} : vector<8x4xf32>, vector<4x8xf32>, vector<8x8xf32> -> vector<8x8xf32>
    %26 = vector.broadcast %22 : vector<8x1xf32> to vector<8x8xf32>
    %27 = arith.addf %25, %26 : vector<8x8xf32>
    %c0_9 = arith.constant 0 : index
    %c0_10 = arith.constant 0 : index
    %c0_11 = arith.constant 0 : index
    %c0_12 = arith.constant 0 : index
    %28 = vector.load %arg5[%c0_9, %c0_10, %c0_11, %c0_12] : memref<1x8x8x8xf32, #tpu.memory_space<vmem>>, vector<1x8x1x8xf32>
    %29 = vector.shape_cast %28 : vector<1x8x1x8xf32> to vector<8x8xf32>
    %30 = vector.shape_cast %27 : vector<8x8xf32> to vector<1x8x1x8xf32>
    tpu.vector_store %arg5[%c0_9, %c0_10, %c0_11, %c0_12], %30 {strides = array<i32>} : memref<1x8x8x8xf32, #tpu.memory_space<vmem>>, vector<1x8x1x8xf32>,
    %31 = vector.extract_strided_slice %20 {offsets = [0, 1, 0], sizes = [4, 1, 8], strides = [1, 1, 1]} : vector<4x8x8xf32> to vector<4x1x8xf32>
    %32 = vector.shape_cast %31 : vector<4x1x8xf32> to vector<4x8xf32>
    %cst_13 = arith.constant dense<0.000000e+00> : vector<8x8xf32>
    %33 = tpu.matmul %21, %32, %cst_13 {dimension_numbers = #tpu.dot_dimension_numbers<[1], [0], [0], [1], [0, 0, 1, 1], [], []>} : vector<8x4xf32>, vector<4x8xf32>, vector<8x8xf32> -> vector<8x8xf32>
    %34 = vector.broadcast %22 : vector<8x1xf32> to vector<8x8xf32>
    %35 = arith.addf %33, %34 : vector<8x8xf32>
    %c0_14 = arith.constant 0 : index
    %c0_15 = arith.constant 0 : index
    %c1 = arith.constant 1 : index
    %c0_16 = arith.constant 0 : index
    %36 = vector.load %arg5[%c0_14, %c0_15, %c1, %c0_16] : memref<1x8x8x8xf32, #tpu.memory_space<vmem>>, vector<1x8x1x8xf32>
    %37 = vector.shape_cast %36 : vector<1x8x1x8xf32> to vector<8x8xf32>
    %38 = vector.shape_cast %35 : vector<8x8xf32> to vector<1x8x1x8xf32>
    tpu.vector_store %arg5[%c0_14, %c0_15, %c1, %c0_16], %38 {strides = array<i32>} : memref<1x8x8x8xf32, #tpu.memory_space<vmem>>, vector<1x8x1x8xf32>,
    %39 = vector.extract_strided_slice %20 {offsets = [0, 2, 0], sizes = [4, 1, 8], strides = [1, 1, 1]} : vector<4x8x8xf32> to vector<4x1x8xf32>
    %40 = vector.shape_cast %39 : vector<4x1x8xf32> to vector<4x8xf32>
    %cst_17 = arith.constant dense<0.000000e+00> : vector<8x8xf32>
    %41 = tpu.matmul %21, %40, %cst_17 {dimension_numbers = #tpu.dot_dimension_numbers<[1], [0], [0], [1], [0, 0, 1, 1], [], []>} : vector<8x4xf32>, vector<4x8xf32>, vector<8x8xf32> -> vector<8x8xf32>
    %42 = vector.broadcast %22 : vector<8x1xf32> to vector<8x8xf32>
    %43 = arith.addf %41, %42 : vector<8x8xf32>
    %c0_18 = arith.constant 0 : index
    %c0_19 = arith.constant 0 : index
    %c2 = arith.constant 2 : index
    %c0_20 = arith.constant 0 : index
    %44 = vector.load %arg5[%c0_18, %c0_19, %c2, %c0_20] : memref<1x8x8x8xf32, #tpu.memory_space<vmem>>, vector<1x8x1x8xf32>
    %45 = vector.shape_cast %44 : vector<1x8x1x8xf32> to vector<8x8xf32>
    %46 = vector.shape_cast %43 : vector<8x8xf32> to vector<1x8x1x8xf32>
    tpu.vector_store %arg5[%c0_18, %c0_19, %c2, %c0_20], %46 {strides = array<i32>} : memref<1x8x8x8xf32, #tpu.memory_space<vmem>>, vector<1x8x1x8xf32>,
    %47 = vector.extract_strided_slice %20 {offsets = [0, 3, 0], sizes = [4, 1, 8], strides = [1, 1, 1]} : vector<4x8x8xf32> to vector<4x1x8xf32>
    %48 = vector.shape_cast %47 : vector<4x1x8xf32> to vector<4x8xf32>
    %cst_21 = arith.constant dense<0.000000e+00> : vector<8x8xf32>
    %49 = tpu.matmul %21, %48, %cst_21 {dimension_numbers = #tpu.dot_dimension_numbers<[1], [0], [0], [1], [0, 0, 1, 1], [], []>} : vector<8x4xf32>, vector<4x8xf32>, vector<8x8xf32> -> vector<8x8xf32>
    %50 = vector.broadcast %22 : vector<8x1xf32> to vector<8x8xf32>
    %51 = arith.addf %49, %50 : vector<8x8xf32>
    %c0_22 = arith.constant 0 : index
    %c0_23 = arith.constant 0 : index
    %c3 = arith.constant 3 : index
    %c0_24 = arith.constant 0 : index
    %52 = vector.load %arg5[%c0_22, %c0_23, %c3, %c0_24] : memref<1x8x8x8xf32, #tpu.memory_space<vmem>>, vector<1x8x1x8xf32>
    %53 = vector.shape_cast %52 : vector<1x8x1x8xf32> to vector<8x8xf32>
    %54 = vector.shape_cast %51 : vector<8x8xf32> to vector<1x8x1x8xf32>
    tpu.vector_store %arg5[%c0_22, %c0_23, %c3, %c0_24], %54 {strides = array<i32>} : memref<1x8x8x8xf32, #tpu.memory_space<vmem>>, vector<1x8x1x8xf32>,
    %55 = vector.extract_strided_slice %20 {offsets = [0, 4, 0], sizes = [4, 1, 8], strides = [1, 1, 1]} : vector<4x8x8xf32> to vector<4x1x8xf32>
    %56 = vector.shape_cast %55 : vector<4x1x8xf32> to vector<4x8xf32>
    %cst_25 = arith.constant dense<0.000000e+00> : vector<8x8xf32>
    %57 = tpu.matmul %21, %56, %cst_25 {dimension_numbers = #tpu.dot_dimension_numbers<[1], [0], [0], [1], [0, 0, 1, 1], [], []>} : vector<8x4xf32>, vector<4x8xf32>, vector<8x8xf32> -> vector<8x8xf32>
    %58 = vector.broadcast %22 : vector<8x1xf32> to vector<8x8xf32>
    %59 = arith.addf %57, %58 : vector<8x8xf32>
    %c0_26 = arith.constant 0 : index
    %c0_27 = arith.constant 0 : index
    %c4 = arith.constant 4 : index
    %c0_28 = arith.constant 0 : index
    %60 = vector.load %arg5[%c0_26, %c0_27, %c4, %c0_28] : memref<1x8x8x8xf32, #tpu.memory_space<vmem>>, vector<1x8x1x8xf32>
    %61 = vector.shape_cast %60 : vector<1x8x1x8xf32> to vector<8x8xf32>
    %62 = vector.shape_cast %59 : vector<8x8xf32> to vector<1x8x1x8xf32>
    tpu.vector_store %arg5[%c0_26, %c0_27, %c4, %c0_28], %62 {strides = array<i32>} : memref<1x8x8x8xf32, #tpu.memory_space<vmem>>, vector<1x8x1x8xf32>,
    %63 = vector.extract_strided_slice %20 {offsets = [0, 5, 0], sizes = [4, 1, 8], strides = [1, 1, 1]} : vector<4x8x8xf32> to vector<4x1x8xf32>
    %64 = vector.shape_cast %63 : vector<4x1x8xf32> to vector<4x8xf32>
    %cst_29 = arith.constant dense<0.000000e+00> : vector<8x8xf32>
    %65 = tpu.matmul %21, %64, %cst_29 {dimension_numbers = #tpu.dot_dimension_numbers<[1], [0], [0], [1], [0, 0, 1, 1], [], []>} : vector<8x4xf32>, vector<4x8xf32>, vector<8x8xf32> -> vector<8x8xf32>
    %66 = vector.broadcast %22 : vector<8x1xf32> to vector<8x8xf32>
    %67 = arith.addf %65, %66 : vector<8x8xf32>
    %c0_30 = arith.constant 0 : index
    %c0_31 = arith.constant 0 : index
    %c5 = arith.constant 5 : index
    %c0_32 = arith.constant 0 : index
    %68 = vector.load %arg5[%c0_30, %c0_31, %c5, %c0_32] : memref<1x8x8x8xf32, #tpu.memory_space<vmem>>, vector<1x8x1x8xf32>
    %69 = vector.shape_cast %68 : vector<1x8x1x8xf32> to vector<8x8xf32>
    %70 = vector.shape_cast %67 : vector<8x8xf32> to vector<1x8x1x8xf32>
    tpu.vector_store %arg5[%c0_30, %c0_31, %c5, %c0_32], %70 {strides = array<i32>} : memref<1x8x8x8xf32, #tpu.memory_space<vmem>>, vector<1x8x1x8xf32>,
    %71 = vector.extract_strided_slice %20 {offsets = [0, 6, 0], sizes = [4, 1, 8], strides = [1, 1, 1]} : vector<4x8x8xf32> to vector<4x1x8xf32>
    %72 = vector.shape_cast %71 : vector<4x1x8xf32> to vector<4x8xf32>
    %cst_33 = arith.constant dense<0.000000e+00> : vector<8x8xf32>
    %73 = tpu.matmul %21, %72, %cst_33 {dimension_numbers = #tpu.dot_dimension_numbers<[1], [0], [0], [1], [0, 0, 1, 1], [], []>} : vector<8x4xf32>, vector<4x8xf32>, vector<8x8xf32> -> vector<8x8xf32>
    %74 = vector.broadcast %22 : vector<8x1xf32> to vector<8x8xf32>
    %75 = arith.addf %73, %74 : vector<8x8xf32>
    %c0_34 = arith.constant 0 : index
    %c0_35 = arith.constant 0 : index
    %c6 = arith.constant 6 : index
    %c0_36 = arith.constant 0 : index
    %76 = vector.load %arg5[%c0_34, %c0_35, %c6, %c0_36] : memref<1x8x8x8xf32, #tpu.memory_space<vmem>>, vector<1x8x1x8xf32>
    %77 = vector.shape_cast %76 : vector<1x8x1x8xf32> to vector<8x8xf32>
    %78 = vector.shape_cast %75 : vector<8x8xf32> to vector<1x8x1x8xf32>
    tpu.vector_store %arg5[%c0_34, %c0_35, %c6, %c0_36], %78 {strides = array<i32>} : memref<1x8x8x8xf32, #tpu.memory_space<vmem>>, vector<1x8x1x8xf32>,
    %79 = vector.extract_strided_slice %20 {offsets = [0, 7, 0], sizes = [4, 1, 8], strides = [1, 1, 1]} : vector<4x8x8xf32> to vector<4x1x8xf32>
    %80 = vector.shape_cast %79 : vector<4x1x8xf32> to vector<4x8xf32>
    %cst_37 = arith.constant dense<0.000000e+00> : vector<8x8xf32>
    %81 = tpu.matmul %21, %80, %cst_37 {dimension_numbers = #tpu.dot_dimension_numbers<[1], [0], [0], [1], [0, 0, 1, 1], [], []>} : vector<8x4xf32>, vector<4x8xf32>, vector<8x8xf32> -> vector<8x8xf32>
    %82 = vector.broadcast %22 : vector<8x1xf32> to vector<8x8xf32>
    %83 = arith.addf %81, %82 : vector<8x8xf32>
    %c0_38 = arith.constant 0 : index
    %c0_39 = arith.constant 0 : index
    %c7 = arith.constant 7 : index
    %c0_40 = arith.constant 0 : index
    %84 = vector.load %arg5[%c0_38, %c0_39, %c7, %c0_40] : memref<1x8x8x8xf32, #tpu.memory_space<vmem>>, vector<1x8x1x8xf32>
    %85 = vector.shape_cast %84 : vector<1x8x1x8xf32> to vector<8x8xf32>
    %86 = vector.shape_cast %83 : vector<8x8xf32> to vector<1x8x1x8xf32>
    tpu.vector_store %arg5[%c0_38, %c0_39, %c7, %c0_40], %86 {strides = array<i32>} : memref<1x8x8x8xf32, #tpu.memory_space<vmem>>, vector<1x8x1x8xf32>,
    return
  }
  func.func @transform_0(%arg0: i32, %arg1: i32) -> (i32, i32, i32, i32) {
    %c0_i32 = arith.constant 0 : i32
    %c0_i32_0 = arith.constant 0 : i32
    %c0_i32_1 = arith.constant 0 : i32
    return %arg0, %c0_i32, %arg1, %c0_i32_0 : i32, i32, i32, i32
  }
  func.func @transform_1(%arg0: i32, %arg1: i32) -> (i32, i32) {
    %c0_i32 = arith.constant 0 : i32
    %c0_i32_0 = arith.constant 0 : i32
    %c0_i32_1 = arith.constant 0 : i32
    return %c0_i32, %c0_i32_0 : i32, i32
  }
  func.func @transform_2(%arg0: i32, %arg1: i32) -> (i32, i32) {
    %c0_i32 = arith.constant 0 : i32
    %c0_i32_0 = arith.constant 0 : i32
    %c0_i32_1 = arith.constant 0 : i32
    return %c0_i32, %c0_i32_0 : i32, i32
  }
  func.func @transform_3(%arg0: i32, %arg1: i32) -> (i32, i32, i32, i32) {
    %c0_i32 = arith.constant 0 : i32
    %c0_i32_0 = arith.constant 0 : i32
    %c0_i32_1 = arith.constant 0 : i32
    return %arg0, %c0_i32, %arg1, %c0_i32_0 : i32, i32, i32, i32
  }
}

</mosaic_0001>

<llo_original>
// kernel: tpu_custom_call.1
$region0: #{tpu_custom_call.1}
  #allocation0 [shape = 'u32[]', space=smem, size = 0x4, offset = 0x4, fixed_abs, tag = 'smem constant byte address 0x4 - core index']
  #allocation1 [shape = 'u32[144,128]{1,0:T(1,128)}', space=vmem, size = 0x12000, scoped, tag = 'internal scratch']
  %s0 = inlined_call_operand.hbm [shape: f32[2,4,8,32], index: 0, kind: input, shape index: {}]
  %s1 = inlined_call_operand.vmem [shape: f32[8,4], index: 1, kind: input, shape index: {}]
  %s2 = inlined_call_operand.vmem [shape: f32[8,1], index: 2, kind: input, shape index: {}]
  %s3 = inlined_call_operand.hbm [shape: f32[2,8,8,8], index: 3, kind: output, shape index: {}]
  %s4 = sld [smem:[#allocation0]]
  $region49: #{tpu_custom_call.1} parent=0
    _
  %s6 = ssub.s32 1, %s4
  %s7 = scalar_select 0, %s6, %s4
  $region1: #{tpu_custom_call.1} parent=0
    #allocation2 [shape = 'u8[32768]{0}', space=vmem, size = 0x8000, scoped, tag = 'input window, operand 0']
    #allocation3 [shape = 's32[2]{0}', space=sflag, size = 0x8, scoped, tag = 'scoped memory for tpu_custom_call.1']
    #allocation4 [shape = 's32[2]{0}', space=sflag, size = 0x8, scoped, tag = 'scoped memory for tpu_custom_call.1']
    #allocation5 [shape = 'u8[65536]{0}', space=vmem, size = 0x10000, scoped, tag = 'output window, operand 0']
    %8 = vsyncpa [#allocation3], 0
    %s9 = scalar_lea.sflag [#allocation3], 1
    %10 = vsyncpa %s9, 0
    %11 = vsyncpa [#allocation4], 0
    %s12 = scalar_lea.sflag [#allocation4], 1
    %13 = vsyncpa %s12, 0
    loop: start=0, step=1, limit=4
    $region2: #{tpu_custom_call.1} parent=1 // loop_pre_header
      _
    $region3: #{tpu_custom_call.1} parent=1 // loop_header
      %s15 = sphi 0, %s19
      %p16 = scmp.ge.s32.totalorder %s15, 4
      %s22 = sphi 0, %s34
      %s23 = sphi 0, %s30
      %s24 = sphi 0, %s22
      %s25 = sphi 0, %s23
      %s26 = sphi 0, %s24
      %s27 = sphi 0, %s25
      %s39 = sphi 0, %s41
      %s42 = sphi 0, %s39
      %s43 = sphi 0, %s42
      %s59 = sphi 0, %s43
      %s63 = sphi 0, %s63
      %s65 = sphi 0, %s63
      %s66 = sphi 0, %s65
      %s80 = sphi 0, %s66
      %s84 = sphi 0, %s84
      %s86 = sphi 0, %s84
      %s87 = sphi 0, %s86
      %s101 = sphi 0, %s87
      %s109 = sphi 0, %s111
      %s112 = sphi 0, %s109
      %s113 = sphi 0, %s112
      %s129 = sphi 0, %s113
    $region4: #{tpu_custom_call.1} parent=1 // loop_header_branch
      %18 = sbr.rel (%p16) target = $region8
    $region5: #{tpu_custom_call.1} parent=1 // loop_body
      %s20 = ssub.s32 %s15, 1
      %s21 = ssub.s32 %s15, 2
      %s28 = sadd.s32 1, %s23
      %p29 = scmp.ge.s32.totalorder %s28, 1
      %s30 = scalar_select %p29, 0, %s28
      %s31 = sadd.s32 1, %s22
      %s32 = scalar_select %p29, %s31, %s22
      %p33 = scmp.ge.s32.totalorder %s32, 2
      %s34 = scalar_select %p33, 0, %s32
      %s35 = ssub.s32 %s22, %s34
      %s36 = ssub.s32 %s23, %s30
      %s37 = sor.u32 %s35, %s36
      %p38 = scmp.eq.s32.totalorder %s37, 0
      %s40 = sadd.s32 %s39, 1
      %s41 = scalar_select %p38, %s39, %s40
      %p44 = pneg %p38
      %p45 = scmp.eq.s32.totalorder %s15, 1
      %p46 = por %p44, %p45
      %p47 = scmp.ne.s32.totalorder %s39, %s42
      %p48 = scmp.eq.s32.totalorder %s15, 0
      %p49 = por %p47, %p48
      %p50 = scmp.ne.s32.totalorder %s39, %s42
      %p51 = scmp.eq.s32.totalorder %s20, 1
      %p52 = por %p50, %p51
      %p53 = scmp.ne.s32.totalorder %s42, %s43
      %p54 = scmp.eq.s32.totalorder %s20, 0
      %p55 = por %p53, %p54
      %p56 = scmp.ne.s32.totalorder %s42, %s43
      %p57 = scmp.eq.s32.totalorder %s21, 1
      %p58 = por %p56, %p57
      %p60 = scmp.ne.s32.totalorder %s43, %s59
      %p61 = scmp.eq.s32.totalorder %s21, 0
      %p62 = por %p60, %p61
      %s64 = sadd.s32 %s63, 1
      %p67 = scmp.eq.s32.totalorder %s15, 1
      %p68 = scmp.ne.s32.totalorder %s63, %s65
      %p69 = scmp.eq.s32.totalorder %s15, 0
      %p70 = por %p68, %p69
      %p71 = scmp.ne.s32.totalorder %s63, %s65
      %p72 = scmp.eq.s32.totalorder %s20, 1
      %p73 = por %p71, %p72
      %p74 = scmp.ne.s32.totalorder %s65, %s66
      %p75 = scmp.eq.s32.totalorder %s20, 0
      %p76 = por %p74, %p75
      %p77 = scmp.ne.s32.totalorder %s65, %s66
      %p78 = scmp.eq.s32.totalorder %s21, 1
      %p79 = por %p77, %p78
      %p81 = scmp.ne.s32.totalorder %s66, %s80
      %p82 = scmp.eq.s32.totalorder %s21, 0
      %p83 = por %p81, %p82
      %s85 = sadd.s32 %s84, 1
      %p88 = scmp.eq.s32.totalorder %s15, 1
      %p89 = scmp.ne.s32.totalorder %s84, %s86
      %p90 = scmp.eq.s32.totalorder %s15, 0
      %p91 = por %p89, %p90
      %p92 = scmp.ne.s32.totalorder %s84, %s86
      %p93 = scmp.eq.s32.totalorder %s20, 1
      %p94 = por %p92, %p93
      %p95 = scmp.ne.s32.totalorder %s86, %s87
      %p96 = scmp.eq.s32.totalorder %s20, 0
      %p97 = por %p95, %p96
      %p98 = scmp.ne.s32.totalorder %s86, %s87
      %p99 = scmp.eq.s32.totalorder %s21, 1
      %p100 = por %p98, %p99
      %p102 = scmp.ne.s32.totalorder %s87, %s101
      %p103 = scmp.eq.s32.totalorder %s21, 0
      %p104 = por %p102, %p103
      %s105 = ssub.s32 %s22, %s34
      %s106 = ssub.s32 %s23, %s30
      %s107 = sor.u32 %s105, %s106
      %p108 = scmp.eq.s32.totalorder %s107, 0
      %s110 = sadd.s32 %s109, 1
      %s111 = scalar_select %p108, %s109, %s110
      %p114 = pneg %p108
      %p115 = scmp.eq.s32.totalorder %s15, 1
      %p116 = por %p114, %p115
      %p117 = scmp.ne.s32.totalorder %s109, %s112
      %p118 = scmp.eq.s32.totalorder %s15, 0
      %p119 = por %p117, %p118
      %p120 = scmp.ne.s32.totalorder %s109, %s112
      %p121 = scmp.eq.s32.totalorder %s20, 1
      %p122 = por %p120, %p121
      %p123 = scmp.ne.s32.totalorder %s112, %s113
      %p124 = scmp.eq.s32.totalorder %s20, 0
      %p125 = por %p123, %p124
      %p126 = scmp.ne.s32.totalorder %s112, %s113
      %p127 = scmp.eq.s32.totalorder %s21, 1
      %p128 = por %p126, %p127
      %p130 = scmp.ne.s32.totalorder %s113, %s129
      %p131 = scmp.eq.s32.totalorder %s21, 0
      %p132 = por %p130, %p131
      %p133 = scmp.le.s32.totalorder 1, %s15
      %p134 = scmp.lt.s32.totalorder %s15, 3
      %p135 = pnand %p133, %p134
      %p136 = pneg %p135
      // Predicated region
      $region9: #{tpu_custom_call.1} parent=5 // pred_check
        _
      $region10: #{tpu_custom_call.1} parent=5 // pred_check_branch
        %138 = sbr.rel (%p135) target = $region12
      $region11: #{tpu_custom_call.1} parent=5 // pred_region
        %s139 = ssub.s32 %s15, 1
        // Predicated region
        $region13: #{tpu_custom_call.1} parent=11 // pred_check
          %p140 = pneg %p76
        $region14: #{tpu_custom_call.1} parent=11 // pred_check_branch
          %142 = sbr.rel (%p140) target = $region16
        $region15: #{tpu_custom_call.1} parent=11 // pred_region
          _
        $region16: #{tpu_custom_call.1} parent=11 // pred_fallthru
          _
        // Predicated region
        $region17: #{tpu_custom_call.1} parent=11 // pred_check
          %p143 = pneg %p97
        $region18: #{tpu_custom_call.1} parent=11 // pred_check_branch
          %145 = sbr.rel (%p143) target = $region20
        $region19: #{tpu_custom_call.1} parent=11 // pred_region
          _
        $region20: #{tpu_custom_call.1} parent=11 // pred_fallthru
          _
      $region12: #{tpu_custom_call.1} parent=5 // pred_fallthru
        _
      %p146 = scmp.lt.s32.totalorder %s15, 2
      // Predicated region
      $region21: #{tpu_custom_call.1} parent=5 // pred_check
        %p147 = pneg %p146
      $region22: #{tpu_custom_call.1} parent=5 // pred_check_branch
        %149 = sbr.rel (%p147) target = $region24
      $region23: #{tpu_custom_call.1} parent=5 // pred_region
        // Predicated region
        $region25: #{tpu_custom_call.1} parent=23 // pred_check
          %p150 = pneg %p49
        $region26: #{tpu_custom_call.1} parent=23 // pred_check_branch
          %152 = sbr.rel (%p150) target = $region28
        $region27: #{tpu_custom_call.1} parent=23 // pred_region
          %s153 = sand.u32 %s39, 1
          %s154 = scalar_lea.sflag [#allocation3], %s153
          %s155 = sand.u32 %s39, 1
          %s156 = smul.addr %s155, 32
          %s157 = scalar_lea.vmem [#allocation2], %s156
          %s159 = ssub.s32 512, 512
          %160 = vsyncadd %s154, %s159
          %s161 = smul.addr %s22, 4
          %s162 = sadd.s32 %s23, %s161
          %s163 = smul.addr %s162, 128
          %s164 = scalar_lea.hbm %s0, %s163
          %s165 = sshll.u32 %s157, 4
          %s166 = int_to_ptr.vmem [resolvable:$true] %s165
          %171 = dma.hbm_to_vmem [thread:$0]  %s164, 512, %s166, %s154, 128, 128, 8
        $region28: #{tpu_custom_call.1} parent=23 // pred_fallthru
          _
      $region24: #{tpu_custom_call.1} parent=5 // pred_fallthru
        _
      %p172 = scmp.le.s32.totalorder 1, %s15
      %p173 = scmp.lt.s32.totalorder %s15, 3
      %p174 = pnand %p172, %p173
      %p175 = pneg %p174
      // Predicated region
      $region29: #{tpu_custom_call.1} parent=5 // pred_check
        _
      $region30: #{tpu_custom_call.1} parent=5 // pred_check_branch
        %177 = sbr.rel (%p174) target = $region32
      $region31: #{tpu_custom_call.1} parent=5 // pred_region
        %s178 = ssub.s32 %s15, 1
        %s179 = sand.u32 %s42, 1
        %s180 = scalar_lea.sflag [#allocation3], %s179
        %s181 = sand.u32 %s42, 1
        %s182 = smul.addr %s181, 32
        %s183 = scalar_lea.vmem [#allocation2], %s182
        // Predicated region
        $region33: #{tpu_custom_call.1} parent=31 // pred_check
          %p184 = pneg %p55
        $region34: #{tpu_custom_call.1} parent=31 // pred_check_branch
          %186 = sbr.rel (%p184) target = $region36
        $region35: #{tpu_custom_call.1} parent=31 // pred_region
          %187 = dma.done %s180, 512
        $region36: #{tpu_custom_call.1} parent=31 // pred_fallthru
          _
        %s188 = sand.u32 %s42, 1
        %s189 = scalar_lea.sflag [#allocation3], %s188
        %s190 = sand.u32 %s42, 1
        %s191 = smul.addr %s190, 32
        %s192 = scalar_lea.vmem [#allocation2], %s191
        %p193 = pneg %p55
        %p194 = pneg %p52
        %p195 = pneg %p76
        %p196 = pneg %p73
        %p197 = pneg %p97
        %p198 = pneg %p94
        %p199 = pneg %p125
        %p200 = pneg %p122
        %s201 = sand.u32 %s112, 1
        %s202 = scalar_lea.sflag [#allocation4], %s201
        %s203 = sand.u32 %s112, 1
        %s204 = smul.addr %s203, 64
        %s205 = scalar_lea.vmem [#allocation5], %s204
        %v206 = vld [vmem:[%s183] sm:$0xff]
        %v207 = vld [vmem:[%s183 + $0x8] sm:$0xff]
        %v208 = vld [vmem:[%s183 + $0x10] sm:$0xff]
        %v209 = vld [vmem:[%s183 + $0x18] sm:$0xff]
        %214 = vrot.lane.b32.xlu0 %v206, 112
        %v215 = vpop.permute.xlu0 %214
        %216 = vrot.lane.b32.xlu0 %v207, 112
        %v217 = vpop.permute.xlu0 %216
        %218 = vrot.lane.b32.xlu0 %v208, 112
        %v219 = vpop.permute.xlu0 %218
        %220 = vrot.lane.b32.xlu0 %v209, 112
        %v221 = vpop.permute.xlu0 %220
        %v226 = vadd.f32 %v206, %v215
        %v227 = vadd.f32 %v207, %v217
        %v228 = vadd.f32 %v208, %v219
        %v229 = vadd.f32 %v209, %v221
        %v230 = vlaneseq
        %v231 = vshrl.u32 %v230, 7
        %v232 = vadd.s32 %v231, 8
        %v233 = vlaneseq
        %v234 = vand.u32 %v233, 127
        %v235 = vmul.u32 %v234, 2
        %vm236 = vcmp.eq.s32.totalorder %v231, %v235
        %vm237 = vcmp.eq.s32.totalorder %v232, %v235
        %v238 = vadd.s32 %v235, 1
        %vm239 = vcmp.eq.s32.totalorder %v231, %v238
        %vm240 = vcmp.eq.s32.totalorder %v232, %v238
        %vm241 = vmor %vm236, %vm239
        %vm242 = vmor %vm237, %vm240
        %v243 = vsel %vm241, 1, 0
        %v244 = vsel %vm242, 1, 0
        %v245 = vcvt.s32.f32 %v243
        %v246 = vcvt.s32.f32 %v244
        %vm247 = vcmask 130048
        %v249 = vsel %vm247, %v226, 0
        %v252 = vsel %vm247, %v227, 0
        %v255 = vsel %vm247, %v228, 0
        %v258 = vsel %vm247, %v229, 0
        %260 = vmatprep.subr.mxu0 0.0
        %261 = vmatpush1.msra.mxu0 %v245
        %262 = vmatprep.subr.mxu0 0.0
        %263 = vmatpush1.msra.mxu0 %v246
        %264 = vmatprep.subr.mxu0 0.0
        %265 = vmatpush1.msra.mxu0 0.0
        %266 = vmatprep.subr.mxu0 0.0
        %267 = vmatpush1.msra.mxu0 0.0
        %268 = vmatprep.subr.mxu0 0.0
        %269 = vmatpush1.msra.mxu0 0.0
        %270 = vmatprep.subr.mxu0 0.0
        %271 = vmatpush1.msra.mxu0 0.0
        %272 = vmatprep.subr.mxu0 0.0
        %273 = vmatpush1.msra.mxu0 0.0
        %274 = vmatprep.subr.mxu0 0.0
        %275 = vmatpush1.msra.mxu0 0.0
        %276 = vmatprep.subr.mxu0 0.0
        %277 = vmatpush1.msra.mxu0 0.0
        %278 = vmatprep.subr.mxu0 0.0
        %279 = vmatpush1.msra.mxu0 0.0
        %280 = vmatprep.subr.mxu0 0.0
        %281 = vmatpush1.msra.mxu0 0.0
        %282 = vmatprep.subr.mxu0 0.0
        %283 = vmatpush1.msra.mxu0 0.0
        %284 = vmatprep.subr.mxu0 0.0
        %285 = vmatpush1.msra.mxu0 0.0
        %286 = vmatprep.subr.mxu0 0.0
        %287 = vmatpush1.msra.mxu0 0.0
        %288 = vmatprep.subr.mxu0 0.0
        %289 = vmatpush1.msra.mxu0 0.0
        %290 = vmatprep.subr.mxu0 0.0
        %291 = vmatpush1.msra.mxu0 0.0
        %292 = vmatprep.subr.mxu0 0.0
        %293 = vmatpush1.msra.mxu0 0.0
        %294 = vmatprep.subr.mxu0 0.0
        %295 = vmatpush1.msra.mxu0 0.0
        %296 = vmatprep.subr.mxu0 0.0
        %297 = vmatpush1.msra.mxu0 0.0
        %298 = vmatprep.subr.mxu0 0.0
        %299 = vmatpush1.msra.mxu0 0.0
        %300 = vmatprep.subr.mxu0 0.0
        %301 = vmatpush1.msra.mxu0 0.0
        %302 = vmatprep.subr.mxu0 0.0
        %303 = vmatpush1.msra.mxu0 0.0
        %304 = vmatprep.subr.mxu0 0.0
        %305 = vmatpush1.msra.mxu0 0.0
        %306 = vmatprep.subr.mxu0 0.0
        %307 = vmatpush1.msra.mxu0 0.0
        %308 = vmatprep.subr.mxu0 0.0
        %309 = vmatpush1.msra.mxu0 0.0
        %310 = vmatprep.subr.mxu0 0.0
        %311 = vmatpush1.msra.mxu0 0.0
        %312 = vmatprep.subr.mxu0 0.0
        %313 = vmatpush1.msra.mxu0 0.0
        %314 = vmatprep.subr.mxu0 0.0
        %315 = vmatpush1.msra.mxu0 0.0
        %316 = vmatprep.subr.mxu0 0.0
        %317 = vmatpush1.msra.mxu0 0.0
        %318 = vmatprep.subr.mxu0 0.0
        %319 = vmatpush1.msra.mxu0 0.0
        %320 = vmatprep.subr.mxu0 0.0
        %321 = vmatpush1.msra.mxu0 0.0
        %322 = vmatprep.subr.mxu0 0.0
        %323 = vmatpush1.msra.mxu0 0.0
        %324 = vmatprep.mubr.f32.mxu0 0.0
        %325 = vmatmul.mubr.f32.gmra.mrb[0].mxu0 %v249
        %v326 = vpop.f32.mrb[0].mxu0
        %v327 = vadd.f32 0.0, %v326
        %v328 = vpop.f32.mrb[0].mxu0
        %329 = vmatprep.mubr.f32.mxu0 0.0
        %330 = vmatmul.mubr.f32.gmra.mrb[0].mxu0 %v252
        %v331 = vpop.f32.mrb[0].mxu0
        %v332 = vadd.f32 0.0, %v331
        %v333 = vpop.f32.mrb[0].mxu0
        %334 = vmatprep.mubr.f32.mxu0 0.0
        %335 = vmatmul.mubr.f32.gmra.mrb[0].mxu0 %v255
        %v336 = vpop.f32.mrb[0].mxu0
        %v337 = vadd.f32 0.0, %v336
        %v338 = vpop.f32.mrb[0].mxu0
        %339 = vmatprep.mubr.f32.mxu0 0.0
        %340 = vmatmul.mubr.f32.gmra.mrb[0].mxu0 %v258
        %v341 = vpop.f32.mrb[0].mxu0
        %v342 = vadd.f32 0.0, %v341
        %v343 = vpop.f32.mrb[0].mxu0
        %344 = vdwg.mxu0
        %v345 = vld [vmem:[%s1] sm:$0xff]
        %v346 = vld [vmem:[%s2] sm:$0xff]
        %348 = vset.pattern.permute.xlu0 0
        %349 = vperm.xlu0 %348, %v346
        %v350 = vpop.permute.xlu0 %349
        %v356 = vrot.slane %v332, 7
        %vm357 = vcmask 1041409
        %v358 = vsel %vm357, %v356, %v327
        %v359 = vrot.slane %v337, 6
        %vm360 = vcmask 1042434
        %v361 = vsel %vm360, %v359, %v358
        %v362 = vrot.slane %v342, 5
        %vm363 = vcmask 1043459
        %v364 = vsel %vm363, %v362, %v361
        %vm365 = vcmask 31744
        %v367 = vsel %vm365, %v345, 0
        %vm369 = vcmask 1043456
        %v370 = vsel %vm369, %v364, 0
        %372 = vmatprep.subr.mxu0 0.0
        %373 = vmatpush1.msra.mxu0 %v370
        %374 = vmatprep.subr.mxu0 0.0
        %375 = vmatpush1.msra.mxu0 0.0
        %376 = vmatprep.subr.mxu0 0.0
        %377 = vmatpush1.msra.mxu0 0.0
        %378 = vmatprep.subr.mxu0 0.0
        %379 = vmatpush1.msra.mxu0 0.0
        %380 = vmatprep.subr.mxu0 0.0
        %381 = vmatpush1.msra.mxu0 0.0
        %382 = vmatprep.subr.mxu0 0.0
        %383 = vmatpush1.msra.mxu0 0.0
        %384 = vmatprep.subr.mxu0 0.0
        %385 = vmatpush1.msra.mxu0 0.0
        %386 = vmatprep.subr.mxu0 0.0
        %387 = vmatpush1.msra.mxu0 0.0
        %388 = vmatprep.subr.mxu0 0.0
        %389 = vmatpush1.msra.mxu0 0.0
        %390 = vmatprep.subr.mxu0 0.0
        %391 = vmatpush1.msra.mxu0 0.0
        %392 = vmatprep.subr.mxu0 0.0
        %393 = vmatpush1.msra.mxu0 0.0
        %394 = vmatprep.subr.mxu0 0.0
        %395 = vmatpush1.msra.mxu0 0.0
        %396 = vmatprep.subr.mxu0 0.0
        %397 = vmatpush1.msra.mxu0 0.0
        %398 = vmatprep.subr.mxu0 0.0
        %399 = vmatpush1.msra.mxu0 0.0
        %400 = vmatprep.subr.mxu0 0.0
        %401 = vmatpush1.msra.mxu0 0.0
        %402 = vmatprep.subr.mxu0 0.0
        %403 = vmatpush1.msra.mxu0 0.0
        %404 = vmatprep.subr.mxu0 0.0
        %405 = vmatpush1.msra.mxu0 0.0
        %406 = vmatprep.subr.mxu0 0.0
        %407 = vmatpush1.msra.mxu0 0.0
        %408 = vmatprep.subr.mxu0 0.0
        %409 = vmatpush1.msra.mxu0 0.0
        %410 = vmatprep.subr.mxu0 0.0
        %411 = vmatpush1.msra.mxu0 0.0
        %412 = vmatprep.subr.mxu0 0.0
        %413 = vmatpush1.msra.mxu0 0.0
        %414 = vmatprep.subr.mxu0 0.0
        %415 = vmatpush1.msra.mxu0 0.0
        %416 = vmatprep.subr.mxu0 0.0
        %417 = vmatpush1.msra.mxu0 0.0
        %418 = vmatprep.subr.mxu0 0.0
        %419 = vmatpush1.msra.mxu0 0.0
        %420 = vmatprep.subr.mxu0 0.0
        %421 = vmatpush1.msra.mxu0 0.0
        %422 = vmatprep.subr.mxu0 0.0
        %423 = vmatpush1.msra.mxu0 0.0
        %424 = vmatprep.subr.mxu0 0.0
        %425 = vmatpush1.msra.mxu0 0.0
        %426 = vmatprep.subr.mxu0 0.0
        %427 = vmatpush1.msra.mxu0 0.0
        %428 = vmatprep.subr.mxu0 0.0
        %429 = vmatpush1.msra.mxu0 0.0
        %430 = vmatprep.subr.mxu0 0.0
        %431 = vmatpush1.msra.mxu0 0.0
        %432 = vmatprep.subr.mxu0 0.0
        %433 = vmatpush1.msra.mxu0 0.0
        %434 = vmatprep.subr.mxu0 0.0
        %435 = vmatpush1.msra.mxu0 0.0
        %436 = vmatprep.mubr.f32.mxu0 0.0
        %437 = vmatmul.mubr.f32.gmra.mrb[0].mxu0 %v367
        %v438 = vpop.f32.mrb[0].mxu0
        %v439 = vadd.f32 %v350, %v438
        %v440 = vpop.f32.mrb[0].mxu0
        %441 = vdwg.mxu0
        %v443 = vcombine.high %v439, %v439
        %v445 = vunpack.c.l.s4 1966171168
        %v446 = vunpack.c.0.s8 %v445
        %v447 = vlaneseq
        %v448 = vshrl.u32 %v447, 7
        %v449 = vsub.s32 %v446, %v448
        %v450 = vrot.slane %v439, %v449
        %v452 = vunpack.c.l.s4 1966171168
        %v453 = vunpack.c.0.s8 %v452
        %v454 = vlaneseq
        %v455 = vshrl.u32 %v454, 7
        %v456 = vsub.s32 %v453, %v455
        %v457 = vrot.slane %v443, %v456
        %v458 = vcombine.high %v450, %v450
        %v459 = vcombine.high %v457, %v457
        %v461 = vunpack.c.l.s4 1966171168
        %v462 = vunpack.c.0.s8 %v461
        %v463 = vlaneseq
        %v464 = vshrl.u32 %v463, 7
        %v465 = vsub.s32 %v462, %v464
        %v466 = vrot.slane %v450, %v465
        %v468 = vunpack.c.l.s4 1966171168
        %v469 = vunpack.c.0.s8 %v468
        %v470 = vlaneseq
        %v471 = vshrl.u32 %v470, 7
        %v472 = vsub.s32 %v469, %v471
        %v473 = vrot.slane %v457, %v472
        %v475 = vunpack.c.l.s4 1966171168
        %v476 = vunpack.c.0.s8 %v475
        %v477 = vlaneseq
        %v478 = vshrl.u32 %v477, 7
        %v479 = vsub.s32 %v476, %v478
        %v480 = vrot.slane %v458, %v479
        %v482 = vunpack.c.l.s4 1966171168
        %v483 = vunpack.c.0.s8 %v482
        %v484 = vlaneseq
        %v485 = vshrl.u32 %v484, 7
        %v486 = vsub.s32 %v483, %v485
        %v487 = vrot.slane %v459, %v486
        %v488 = vcombine.high %v466, %v466
        %v489 = vcombine.high %v473, %v473
        %v490 = vcombine.high %v480, %v480
        %v491 = vcombine.high %v487, %v487
        %vm500 = vcmask 57344
        %501 = vst.msk [vmem:[%s205] sm:$0x1] %vm500, %v466
        %502 = vst.msk [vmem:[%s205 + $0x8] sm:$0x1] %vm500, %v480
        %503 = vst.msk [vmem:[%s205 + $0x10] sm:$0x1] %vm500, %v488
        %504 = vst.msk [vmem:[%s205 + $0x18] sm:$0x1] %vm500, %v490
        %505 = vst.msk [vmem:[%s205 + $0x20] sm:$0x1] %vm500, %v473
        %506 = vst.msk [vmem:[%s205 + $0x28] sm:$0x1] %vm500, %v487
        %507 = vst.msk [vmem:[%s205 + $0x30] sm:$0x1] %vm500, %v489
        %508 = vst.msk [vmem:[%s205 + $0x38] sm:$0x1] %vm500, %v491
        %v509 = vrot.slane %v327, 1
        %v510 = vsel %vm357, %v332, %v509
        %v511 = vrot.slane %v337, 7
        %v512 = vsel %vm360, %v511, %v510
        %v513 = vrot.slane %v342, 6
        %v514 = vsel %vm363, %v513, %v512
        %v515 = vsel %vm369, %v514, 0
        %517 = vmatprep.subr.mxu0 0.0
        %518 = vmatpush1.msra.mxu0 %v515
        %519 = vmatprep.subr.mxu0 0.0
        %520 = vmatpush1.msra.mxu0 0.0
        %521 = vmatprep.subr.mxu0 0.0
        %522 = vmatpush1.msra.mxu0 0.0
        %523 = vmatprep.subr.mxu0 0.0
        %524 = vmatpush1.msra.mxu0 0.0
        %525 = vmatprep.subr.mxu0 0.0
        %526 = vmatpush1.msra.mxu0 0.0
        %527 = vmatprep.subr.mxu0 0.0
        %528 = vmatpush1.msra.mxu0 0.0
        %529 = vmatprep.subr.mxu0 0.0
        %530 = vmatpush1.msra.mxu0 0.0
        %531 = vmatprep.subr.mxu0 0.0
        %532 = vmatpush1.msra.mxu0 0.0
        %533 = vmatprep.subr.mxu0 0.0
        %534 = vmatpush1.msra.mxu0 0.0
        %535 = vmatprep.subr.mxu0 0.0
        %536 = vmatpush1.msra.mxu0 0.0
        %537 = vmatprep.subr.mxu0 0.0
        %538 = vmatpush1.msra.mxu0 0.0
        %539 = vmatprep.subr.mxu0 0.0
        %540 = vmatpush1.msra.mxu0 0.0
        %541 = vmatprep.subr.mxu0 0.0
        %542 = vmatpush1.msra.mxu0 0.0
        %543 = vmatprep.subr.mxu0 0.0
        %544 = vmatpush1.msra.mxu0 0.0
        %545 = vmatprep.subr.mxu0 0.0
        %546 = vmatpush1.msra.mxu0 0.0
        %547 = vmatprep.subr.mxu0 0.0
        %548 = vmatpush1.msra.mxu0 0.0
        %549 = vmatprep.subr.mxu0 0.0
        %550 = vmatpush1.msra.mxu0 0.0
        %551 = vmatprep.subr.mxu0 0.0
        %552 = vmatpush1.msra.mxu0 0.0
        %553 = vmatprep.subr.mxu0 0.0
        %554 = vmatpush1.msra.mxu0 0.0
        %555 = vmatprep.subr.mxu0 0.0
        %556 = vmatpush1.msra.mxu0 0.0
        %557 = vmatprep.subr.mxu0 0.0
        %558 = vmatpush1.msra.mxu0 0.0
        %559 = vmatprep.subr.mxu0 0.0
        %560 = vmatpush1.msra.mxu0 0.0
        %561 = vmatprep.subr.mxu0 0.0
        %562 = vmatpush1.msra.mxu0 0.0
        %563 = vmatprep.subr.mxu0 0.0
        %564 = vmatpush1.msra.mxu0 0.0
        %565 = vmatprep.subr.mxu0 0.0
        %566 = vmatpush1.msra.mxu0 0.0
        %567 = vmatprep.subr.mxu0 0.0
        %568 = vmatpush1.msra.mxu0 0.0
        %569 = vmatprep.subr.mxu0 0.0
        %570 = vmatpush1.msra.mxu0 0.0
        %571 = vmatprep.subr.mxu0 0.0
        %572 = vmatpush1.msra.mxu0 0.0
        %573 = vmatprep.subr.mxu0 0.0
        %574 = vmatpush1.msra.mxu0 0.0
        %575 = vmatprep.subr.mxu0 0.0
        %576 = vmatpush1.msra.mxu0 0.0
        %577 = vmatprep.subr.mxu0 0.0
        %578 = vmatpush1.msra.mxu0 0.0
        %579 = vmatprep.subr.mxu0 0.0
        %580 = vmatpush1.msra.mxu0 0.0
        %581 = vmatprep.mubr.f32.mxu0 0.0
        %582 = vmatmul.mubr.f32.gmra.mrb[0].mxu0 %v367
        %v583 = vpop.f32.mrb[0].mxu0
        %v584 = vadd.f32 %v350, %v583
        %v585 = vpop.f32.mrb[0].mxu0
        %586 = vdwg.mxu0
        %v588 = vcombine.high %v584, %v584
        %v590 = vunpack.c.l.s4 1966171168
        %v591 = vunpack.c.0.s8 %v590
        %v592 = vlaneseq
        %v593 = vshrl.u32 %v592, 7
        %v594 = vsub.s32 %v591, %v593
        %v595 = vrot.slane %v584, %v594
        %v597 = vunpack.c.l.s4 1966171168
        %v598 = vunpack.c.0.s8 %v597
        %v599 = vlaneseq
        %v600 = vshrl.u32 %v599, 7
        %v601 = vsub.s32 %v598, %v600
        %v602 = vrot.slane %v588, %v601
        %v603 = vcombine.high %v595, %v595
        %v604 = vcombine.high %v602, %v602
        %v606 = vunpack.c.l.s4 1966171168
        %v607 = vunpack.c.0.s8 %v606
        %v608 = vlaneseq
        %v609 = vshrl.u32 %v608, 7
        %v610 = vsub.s32 %v607, %v609
        %v611 = vrot.slane %v595, %v610
        %v613 = vunpack.c.l.s4 1966171168
        %v614 = vunpack.c.0.s8 %v613
        %v615 = vlaneseq
        %v616 = vshrl.u32 %v615, 7
        %v617 = vsub.s32 %v614, %v616
        %v618 = vrot.slane %v602, %v617
        %v620 = vunpack.c.l.s4 1966171168
        %v621 = vunpack.c.0.s8 %v620
        %v622 = vlaneseq
        %v623 = vshrl.u32 %v622, 7
        %v624 = vsub.s32 %v621, %v623
        %v625 = vrot.slane %v603, %v624
        %v627 = vunpack.c.l.s4 1966171168
        %v628 = vunpack.c.0.s8 %v627
        %v629 = vlaneseq
        %v630 = vshrl.u32 %v629, 7
        %v631 = vsub.s32 %v628, %v630
        %v632 = vrot.slane %v604, %v631
        %v633 = vcombine.high %v611, %v611
        %v634 = vcombine.high %v618, %v618
        %v635 = vcombine.high %v625, %v625
        %v636 = vcombine.high %v632, %v632
        %645 = vst.msk [vmem:[%s205 + $0x1] sm:$0x1] %vm500, %v611
        %646 = vst.msk [vmem:[%s205 + $0x9] sm:$0x1] %vm500, %v625
        %647 = vst.msk [vmem:[%s205 + $0x11] sm:$0x1] %vm500, %v633
        %648 = vst.msk [vmem:[%s205 + $0x19] sm:$0x1] %vm500, %v635
        %649 = vst.msk [vmem:[%s205 + $0x21] sm:$0x1] %vm500, %v618
        %650 = vst.msk [vmem:[%s205 + $0x29] sm:$0x1] %vm500, %v632
        %651 = vst.msk [vmem:[%s205 + $0x31] sm:$0x1] %vm500, %v634
        %652 = vst.msk [vmem:[%s205 + $0x39] sm:$0x1] %vm500, %v636
        %v653 = vrot.slane %v327, 2
        %v654 = vrot.slane %v332, 1
        %v655 = vsel %vm357, %v654, %v653
        %v656 = vsel %vm360, %v337, %v655
        %v657 = vrot.slane %v342, 7
        %v658 = vsel %vm363, %v657, %v656
        %v659 = vsel %vm369, %v658, 0
        %661 = vmatprep.subr.mxu0 0.0
        %662 = vmatpush1.msra.mxu0 %v659
        %663 = vmatprep.subr.mxu0 0.0
        %664 = vmatpush1.msra.mxu0 0.0
        %665 = vmatprep.subr.mxu0 0.0
        %666 = vmatpush1.msra.mxu0 0.0
        %667 = vmatprep.subr.mxu0 0.0
        %668 = vmatpush1.msra.mxu0 0.0
        %669 = vmatprep.subr.mxu0 0.0
        %670 = vmatpush1.msra.mxu0 0.0
        %671 = vmatprep.subr.mxu0 0.0
        %672 = vmatpush1.msra.mxu0 0.0
        %673 = vmatprep.subr.mxu0 0.0
        %674 = vmatpush1.msra.mxu0 0.0
        %675 = vmatprep.subr.mxu0 0.0
        %676 = vmatpush1.msra.mxu0 0.0
        %677 = vmatprep.subr.mxu0 0.0
        %678 = vmatpush1.msra.mxu0 0.0
        %679 = vmatprep.subr.mxu0 0.0
        %680 = vmatpush1.msra.mxu0 0.0
        %681 = vmatprep.subr.mxu0 0.0
        %682 = vmatpush1.msra.mxu0 0.0
        %683 = vmatprep.subr.mxu0 0.0
        %684 = vmatpush1.msra.mxu0 0.0
        %685 = vmatprep.subr.mxu0 0.0
        %686 = vmatpush1.msra.mxu0 0.0
        %687 = vmatprep.subr.mxu0 0.0
        %688 = vmatpush1.msra.mxu0 0.0
        %689 = vmatprep.subr.mxu0 0.0
        %690 = vmatpush1.msra.mxu0 0.0
        %691 = vmatprep.subr.mxu0 0.0
        %692 = vmatpush1.msra.mxu0 0.0
        %693 = vmatprep.subr.mxu0 0.0
        %694 = vmatpush1.msra.mxu0 0.0
        %695 = vmatprep.subr.mxu0 0.0
        %696 = vmatpush1.msra.mxu0 0.0
        %697 = vmatprep.subr.mxu0 0.0
        %698 = vmatpush1.msra.mxu0 0.0
        %699 = vmatprep.subr.mxu0 0.0
        %700 = vmatpush1.msra.mxu0 0.0
        %701 = vmatprep.subr.mxu0 0.0
        %702 = vmatpush1.msra.mxu0 0.0
        %703 = vmatprep.subr.mxu0 0.0
        %704 = vmatpush1.msra.mxu0 0.0
        %705 = vmatprep.subr.mxu0 0.0
        %706 = vmatpush1.msra.mxu0 0.0
        %707 = vmatprep.subr.mxu0 0.0
        %708 = vmatpush1.msra.mxu0 0.0
        %709 = vmatprep.subr.mxu0 0.0
        %710 = vmatpush1.msra.mxu0 0.0
        %711 = vmatprep.subr.mxu0 0.0
        %712 = vmatpush1.msra.mxu0 0.0
        %713 = vmatprep.subr.mxu0 0.0
        %714 = vmatpush1.msra.mxu0 0.0
        %715 = vmatprep.subr.mxu0 0.0
        %716 = vmatpush1.msra.mxu0 0.0
        %717 = vmatprep.subr.mxu0 0.0
        %718 = vmatpush1.msra.mxu0 0.0
        %719 = vmatprep.subr.mxu0 0.0
        %720 = vmatpush1.msra.mxu0 0.0
        %721 = vmatprep.subr.mxu0 0.0
        %722 = vmatpush1.msra.mxu0 0.0
        %723 = vmatprep.subr.mxu0 0.0
        %724 = vmatpush1.msra.mxu0 0.0
        %725 = vmatprep.mubr.f32.mxu0 0.0
        %726 = vmatmul.mubr.f32.gmra.mrb[0].mxu0 %v367
        %v727 = vpop.f32.mrb[0].mxu0
        %v728 = vadd.f32 %v350, %v727
        %v729 = vpop.f32.mrb[0].mxu0
        %730 = vdwg.mxu0
        %v732 = vcombine.high %v728, %v728
        %v734 = vunpack.c.l.s4 1966171168
        %v735 = vunpack.c.0.s8 %v734
        %v736 = vlaneseq
        %v737 = vshrl.u32 %v736, 7
        %v738 = vsub.s32 %v735, %v737
        %v739 = vrot.slane %v728, %v738
        %v741 = vunpack.c.l.s4 1966171168
        %v742 = vunpack.c.0.s8 %v741
        %v743 = vlaneseq
        %v744 = vshrl.u32 %v743, 7
        %v745 = vsub.s32 %v742, %v744
        %v746 = vrot.slane %v732, %v745
        %v747 = vcombine.high %v739, %v739
        %v748 = vcombine.high %v746, %v746
        %v750 = vunpack.c.l.s4 1966171168
        %v751 = vunpack.c.0.s8 %v750
        %v752 = vlaneseq
        %v753 = vshrl.u32 %v752, 7
        %v754 = vsub.s32 %v751, %v753
        %v755 = vrot.slane %v739, %v754
        %v757 = vunpack.c.l.s4 1966171168
        %v758 = vunpack.c.0.s8 %v757
        %v759 = vlaneseq
        %v760 = vshrl.u32 %v759, 7
        %v761 = vsub.s32 %v758, %v760
        %v762 = vrot.slane %v746, %v761
        %v764 = vunpack.c.l.s4 1966171168
        %v765 = vunpack.c.0.s8 %v764
        %v766 = vlaneseq
        %v767 = vshrl.u32 %v766, 7
        %v768 = vsub.s32 %v765, %v767
        %v769 = vrot.slane %v747, %v768
        %v771 = vunpack.c.l.s4 1966171168
        %v772 = vunpack.c.0.s8 %v771
        %v773 = vlaneseq
        %v774 = vshrl.u32 %v773, 7
        %v775 = vsub.s32 %v772, %v774
        %v776 = vrot.slane %v748, %v775
        %v777 = vcombine.high %v755, %v755
        %v778 = vcombine.high %v762, %v762
        %v779 = vcombine.high %v769, %v769
        %v780 = vcombine.high %v776, %v776
        %789 = vst.msk [vmem:[%s205 + $0x2] sm:$0x1] %vm500, %v755
        %790 = vst.msk [vmem:[%s205 + $0xa] sm:$0x1] %vm500, %v769
        %791 = vst.msk [vmem:[%s205 + $0x12] sm:$0x1] %vm500, %v777
        %792 = vst.msk [vmem:[%s205 + $0x1a] sm:$0x1] %vm500, %v779
        %793 = vst.msk [vmem:[%s205 + $0x22] sm:$0x1] %vm500, %v762
        %794 = vst.msk [vmem:[%s205 + $0x2a] sm:$0x1] %vm500, %v776
        %795 = vst.msk [vmem:[%s205 + $0x32] sm:$0x1] %vm500, %v778
        %796 = vst.msk [vmem:[%s205 + $0x3a] sm:$0x1] %vm500, %v780
        %v797 = vrot.slane %v327, 3
        %v798 = vrot.slane %v332, 2
        %v799 = vsel %vm357, %v798, %v797
        %v800 = vrot.slane %v337, 1
        %v801 = vsel %vm360, %v800, %v799
        %v802 = vsel %vm363, %v342, %v801
        %v803 = vsel %vm369, %v802, 0
        %805 = vmatprep.subr.mxu0 0.0
        %806 = vmatpush1.msra.mxu0 %v803
        %807 = vmatprep.subr.mxu0 0.0
        %808 = vmatpush1.msra.mxu0 0.0
        %809 = vmatprep.subr.mxu0 0.0
        %810 = vmatpush1.msra.mxu0 0.0
        %811 = vmatprep.subr.mxu0 0.0
        %812 = vmatpush1.msra.mxu0 0.0
        %813 = vmatprep.subr.mxu0 0.0
        %814 = vmatpush1.msra.mxu0 0.0
        %815 = vmatprep.subr.mxu0 0.0
        %816 = vmatpush1.msra.mxu0 0.0
        %817 = vmatprep.subr.mxu0 0.0
        %818 = vmatpush1.msra.mxu0 0.0
        %819 = vmatprep.subr.mxu0 0.0
        %820 = vmatpush1.msra.mxu0 0.0
        %821 = vmatprep.subr.mxu0 0.0
        %822 = vmatpush1.msra.mxu0 0.0
        %823 = vmatprep.subr.mxu0 0.0
        %824 = vmatpush1.msra.mxu0 0.0
        %825 = vmatprep.subr.mxu0 0.0
        %826 = vmatpush1.msra.mxu0 0.0
        %827 = vmatprep.subr.mxu0 0.0
        %828 = vmatpush1.msra.mxu0 0.0
        %829 = vmatprep.subr.mxu0 0.0
        %830 = vmatpush1.msra.mxu0 0.0
        %831 = vmatprep.subr.mxu0 0.0
        %832 = vmatpush1.msra.mxu0 0.0
        %833 = vmatprep.subr.mxu0 0.0
        %834 = vmatpush1.msra.mxu0 0.0
        %835 = vmatprep.subr.mxu0 0.0
        %836 = vmatpush1.msra.mxu0 0.0
        %837 = vmatprep.subr.mxu0 0.0
        %838 = vmatpush1.msra.mxu0 0.0
        %839 = vmatprep.subr.mxu0 0.0
        %840 = vmatpush1.msra.mxu0 0.0
        %841 = vmatprep.subr.mxu0 0.0
        %842 = vmatpush1.msra.mxu0 0.0
        %843 = vmatprep.subr.mxu0 0.0
        %844 = vmatpush1.msra.mxu0 0.0
        %845 = vmatprep.subr.mxu0 0.0
        %846 = vmatpush1.msra.mxu0 0.0
        %847 = vmatprep.subr.mxu0 0.0
        %848 = vmatpush1.msra.mxu0 0.0
        %849 = vmatprep.subr.mxu0 0.0
        %850 = vmatpush1.msra.mxu0 0.0
        %851 = vmatprep.subr.mxu0 0.0
        %852 = vmatpush1.msra.mxu0 0.0
        %853 = vmatprep.subr.mxu0 0.0
        %854 = vmatpush1.msra.mxu0 0.0
        %855 = vmatprep.subr.mxu0 0.0
        %856 = vmatpush1.msra.mxu0 0.0
        %857 = vmatprep.subr.mxu0 0.0
        %858 = vmatpush1.msra.mxu0 0.0
        %859 = vmatprep.subr.mxu0 0.0
        %860 = vmatpush1.msra.mxu0 0.0
        %861 = vmatprep.subr.mxu0 0.0
        %862 = vmatpush1.msra.mxu0 0.0
        %863 = vmatprep.subr.mxu0 0.0
        %864 = vmatpush1.msra.mxu0 0.0
        %865 = vmatprep.subr.mxu0 0.0
        %866 = vmatpush1.msra.mxu0 0.0
        %867 = vmatprep.subr.mxu0 0.0
        %868 = vmatpush1.msra.mxu0 0.0
        %869 = vmatprep.mubr.f32.mxu0 0.0
        %870 = vmatmul.mubr.f32.gmra.mrb[0].mxu0 %v367
        %v871 = vpop.f32.mrb[0].mxu0
        %v872 = vadd.f32 %v350, %v871
        %v873 = vpop.f32.mrb[0].mxu0
        %874 = vdwg.mxu0
        %v876 = vcombine.high %v872, %v872
        %v878 = vunpack.c.l.s4 1966171168
        %v879 = vunpack.c.0.s8 %v878
        %v880 = vlaneseq
        %v881 = vshrl.u32 %v880, 7
        %v882 = vsub.s32 %v879, %v881
        %v883 = vrot.slane %v872, %v882
        %v885 = vunpack.c.l.s4 1966171168
        %v886 = vunpack.c.0.s8 %v885
        %v887 = vlaneseq
        %v888 = vshrl.u32 %v887, 7
        %v889 = vsub.s32 %v886, %v888
        %v890 = vrot.slane %v876, %v889
        %v891 = vcombine.high %v883, %v883
        %v892 = vcombine.high %v890, %v890
        %v894 = vunpack.c.l.s4 1966171168
        %v895 = vunpack.c.0.s8 %v894
        %v896 = vlaneseq
        %v897 = vshrl.u32 %v896, 7
        %v898 = vsub.s32 %v895, %v897
        %v899 = vrot.slane %v883, %v898
        %v901 = vunpack.c.l.s4 1966171168
        %v902 = vunpack.c.0.s8 %v901
        %v903 = vlaneseq
        %v904 = vshrl.u32 %v903, 7
        %v905 = vsub.s32 %v902, %v904
        %v906 = vrot.slane %v890, %v905
        %v908 = vunpack.c.l.s4 1966171168
        %v909 = vunpack.c.0.s8 %v908
        %v910 = vlaneseq
        %v911 = vshrl.u32 %v910, 7
        %v912 = vsub.s32 %v909, %v911
        %v913 = vrot.slane %v891, %v912
        %v915 = vunpack.c.l.s4 1966171168
        %v916 = vunpack.c.0.s8 %v915
        %v917 = vlaneseq
        %v918 = vshrl.u32 %v917, 7
        %v919 = vsub.s32 %v916, %v918
        %v920 = vrot.slane %v892, %v919
        %v921 = vcombine.high %v899, %v899
        %v922 = vcombine.high %v906, %v906
        %v923 = vcombine.high %v913, %v913
        %v924 = vcombine.high %v920, %v920
        %933 = vst.msk [vmem:[%s205 + $0x3] sm:$0x1] %vm500, %v899
        %934 = vst.msk [vmem:[%s205 + $0xb] sm:$0x1] %vm500, %v913
        %935 = vst.msk [vmem:[%s205 + $0x13] sm:$0x1] %vm500, %v921
        %936 = vst.msk [vmem:[%s205 + $0x1b] sm:$0x1] %vm500, %v923
        %937 = vst.msk [vmem:[%s205 + $0x23] sm:$0x1] %vm500, %v906
        %938 = vst.msk [vmem:[%s205 + $0x2b] sm:$0x1] %vm500, %v920
        %939 = vst.msk [vmem:[%s205 + $0x33] sm:$0x1] %vm500, %v922
        %940 = vst.msk [vmem:[%s205 + $0x3b] sm:$0x1] %vm500, %v924
        %v941 = vrot.slane %v327, 4
        %v942 = vrot.slane %v332, 3
        %v943 = vsel %vm357, %v942, %v941
        %v944 = vrot.slane %v337, 2
        %v945 = vsel %vm360, %v944, %v943
        %v946 = vrot.slane %v342, 1
        %v947 = vsel %vm363, %v946, %v945
        %v948 = vsel %vm369, %v947, 0
        %950 = vmatprep.subr.mxu0 0.0
        %951 = vmatpush1.msra.mxu0 %v948
        %952 = vmatprep.subr.mxu0 0.0
        %953 = vmatpush1.msra.mxu0 0.0
        %954 = vmatprep.subr.mxu0 0.0
        %955 = vmatpush1.msra.mxu0 0.0
        %956 = vmatprep.subr.mxu0 0.0
        %957 = vmatpush1.msra.mxu0 0.0
        %958 = vmatprep.subr.mxu0 0.0
        %959 = vmatpush1.msra.mxu0 0.0
        %960 = vmatprep.subr.mxu0 0.0
        %961 = vmatpush1.msra.mxu0 0.0
        %962 = vmatprep.subr.mxu0 0.0
        %963 = vmatpush1.msra.mxu0 0.0
        %964 = vmatprep.subr.mxu0 0.0
        %965 = vmatpush1.msra.mxu0 0.0
        %966 = vmatprep.subr.mxu0 0.0
        %967 = vmatpush1.msra.mxu0 0.0
        %968 = vmatprep.subr.mxu0 0.0
        %969 = vmatpush1.msra.mxu0 0.0
        %970 = vmatprep.subr.mxu0 0.0
        %971 = vmatpush1.msra.mxu0 0.0
        %972 = vmatprep.subr.mxu0 0.0
        %973 = vmatpush1.msra.mxu0 0.0
        %974 = vmatprep.subr.mxu0 0.0
        %975 = vmatpush1.msra.mxu0 0.0
        %976 = vmatprep.subr.mxu0 0.0
        %977 = vmatpush1.msra.mxu0 0.0
        %978 = vmatprep.subr.mxu0 0.0
        %979 = vmatpush1.msra.mxu0 0.0
        %980 = vmatprep.subr.mxu0 0.0
        %981 = vmatpush1.msra.mxu0 0.0
        %982 = vmatprep.subr.mxu0 0.0
        %983 = vmatpush1.msra.mxu0 0.0
        %984 = vmatprep.subr.mxu0 0.0
        %985 = vmatpush1.msra.mxu0 0.0
        %986 = vmatprep.subr.mxu0 0.0
        %987 = vmatpush1.msra.mxu0 0.0
        %988 = vmatprep.subr.mxu0 0.0
        %989 = vmatpush1.msra.mxu0 0.0
        %990 = vmatprep.subr.mxu0 0.0
        %991 = vmatpush1.msra.mxu0 0.0
        %992 = vmatprep.subr.mxu0 0.0
        %993 = vmatpush1.msra.mxu0 0.0
        %994 = vmatprep.subr.mxu0 0.0
        %995 = vmatpush1.msra.mxu0 0.0
        %996 = vmatprep.subr.mxu0 0.0
        %997 = vmatpush1.msra.mxu0 0.0
        %998 = vmatprep.subr.mxu0 0.0
        %999 = vmatpush1.msra.mxu0 0.0
        %1000 = vmatprep.subr.mxu0 0.0
        %1001 = vmatpush1.msra.mxu0 0.0
        %1002 = vmatprep.subr.mxu0 0.0
        %1003 = vmatpush1.msra.mxu0 0.0
        %1004 = vmatprep.subr.mxu0 0.0
        %1005 = vmatpush1.msra.mxu0 0.0
        %1006 = vmatprep.subr.mxu0 0.0
        %1007 = vmatpush1.msra.mxu0 0.0
        %1008 = vmatprep.subr.mxu0 0.0
        %1009 = vmatpush1.msra.mxu0 0.0
        %1010 = vmatprep.subr.mxu0 0.0
        %1011 = vmatpush1.msra.mxu0 0.0
        %1012 = vmatprep.subr.mxu0 0.0
        %1013 = vmatpush1.msra.mxu0 0.0
        %1014 = vmatprep.mubr.f32.mxu0 0.0
        %1015 = vmatmul.mubr.f32.gmra.mrb[0].mxu0 %v367
        %v1016 = vpop.f32.mrb[0].mxu0
        %v1017 = vadd.f32 %v350, %v1016
        %v1018 = vpop.f32.mrb[0].mxu0
        %1019 = vdwg.mxu0
        %v1021 = vcombine.high %v1017, %v1017
        %v1023 = vunpack.c.l.s4 1966171168
        %v1024 = vunpack.c.0.s8 %v1023
        %v1025 = vlaneseq
        %v1026 = vshrl.u32 %v1025, 7
        %v1027 = vsub.s32 %v1024, %v1026
        %v1028 = vrot.slane %v1017, %v1027
        %v1030 = vunpack.c.l.s4 1966171168
        %v1031 = vunpack.c.0.s8 %v1030
        %v1032 = vlaneseq
        %v1033 = vshrl.u32 %v1032, 7
        %v1034 = vsub.s32 %v1031, %v1033
        %v1035 = vrot.slane %v1021, %v1034
        %v1036 = vcombine.high %v1028, %v1028
        %v1037 = vcombine.high %v1035, %v1035
        %v1039 = vunpack.c.l.s4 1966171168
        %v1040 = vunpack.c.0.s8 %v1039
        %v1041 = vlaneseq
        %v1042 = vshrl.u32 %v1041, 7
        %v1043 = vsub.s32 %v1040, %v1042
        %v1044 = vrot.slane %v1028, %v1043
        %v1046 = vunpack.c.l.s4 1966171168
        %v1047 = vunpack.c.0.s8 %v1046
        %v1048 = vlaneseq
        %v1049 = vshrl.u32 %v1048, 7
        %v1050 = vsub.s32 %v1047, %v1049
        %v1051 = vrot.slane %v1035, %v1050
        %v1053 = vunpack.c.l.s4 1966171168
        %v1054 = vunpack.c.0.s8 %v1053
        %v1055 = vlaneseq
        %v1056 = vshrl.u32 %v1055, 7
        %v1057 = vsub.s32 %v1054, %v1056
        %v1058 = vrot.slane %v1036, %v1057
        %v1060 = vunpack.c.l.s4 1966171168
        %v1061 = vunpack.c.0.s8 %v1060
        %v1062 = vlaneseq
        %v1063 = vshrl.u32 %v1062, 7
        %v1064 = vsub.s32 %v1061, %v1063
        %v1065 = vrot.slane %v1037, %v1064
        %v1066 = vcombine.high %v1044, %v1044
        %v1067 = vcombine.high %v1051, %v1051
        %v1068 = vcombine.high %v1058, %v1058
        %v1069 = vcombine.high %v1065, %v1065
        %1078 = vst.msk [vmem:[%s205 + $0x4] sm:$0x1] %vm500, %v1044
        %1079 = vst.msk [vmem:[%s205 + $0xc] sm:$0x1] %vm500, %v1058
        %1080 = vst.msk [vmem:[%s205 + $0x14] sm:$0x1] %vm500, %v1066
        %1081 = vst.msk [vmem:[%s205 + $0x1c] sm:$0x1] %vm500, %v1068
        %1082 = vst.msk [vmem:[%s205 + $0x24] sm:$0x1] %vm500, %v1051
        %1083 = vst.msk [vmem:[%s205 + $0x2c] sm:$0x1] %vm500, %v1065
        %1084 = vst.msk [vmem:[%s205 + $0x34] sm:$0x1] %vm500, %v1067
        %1085 = vst.msk [vmem:[%s205 + $0x3c] sm:$0x1] %vm500, %v1069
        %v1086 = vrot.slane %v327, 5
        %v1087 = vrot.slane %v332, 4
        %v1088 = vsel %vm357, %v1087, %v1086
        %v1089 = vrot.slane %v337, 3
        %v1090 = vsel %vm360, %v1089, %v1088
        %v1091 = vrot.slane %v342, 2
        %v1092 = vsel %vm363, %v1091, %v1090
        %v1093 = vsel %vm369, %v1092, 0
        %1095 = vmatprep.subr.mxu0 0.0
        %1096 = vmatpush1.msra.mxu0 %v1093
        %1097 = vmatprep.subr.mxu0 0.0
        %1098 = vmatpush1.msra.mxu0 0.0
        %1099 = vmatprep.subr.mxu0 0.0
        %1100 = vmatpush1.msra.mxu0 0.0
        %1101 = vmatprep.subr.mxu0 0.0
        %1102 = vmatpush1.msra.mxu0 0.0
        %1103 = vmatprep.subr.mxu0 0.0
        %1104 = vmatpush1.msra.mxu0 0.0
        %1105 = vmatprep.subr.mxu0 0.0
        %1106 = vmatpush1.msra.mxu0 0.0
        %1107 = vmatprep.subr.mxu0 0.0
        %1108 = vmatpush1.msra.mxu0 0.0
        %1109 = vmatprep.subr.mxu0 0.0
        %1110 = vmatpush1.msra.mxu0 0.0
        %1111 = vmatprep.subr.mxu0 0.0
        %1112 = vmatpush1.msra.mxu0 0.0
        %1113 = vmatprep.subr.mxu0 0.0
        %1114 = vmatpush1.msra.mxu0 0.0
        %1115 = vmatprep.subr.mxu0 0.0
        %1116 = vmatpush1.msra.mxu0 0.0
        %1117 = vmatprep.subr.mxu0 0.0
        %1118 = vmatpush1.msra.mxu0 0.0
        %1119 = vmatprep.subr.mxu0 0.0
        %1120 = vmatpush1.msra.mxu0 0.0
        %1121 = vmatprep.subr.mxu0 0.0
        %1122 = vmatpush1.msra.mxu0 0.0
        %1123 = vmatprep.subr.mxu0 0.0
        %1124 = vmatpush1.msra.mxu0 0.0
        %1125 = vmatprep.subr.mxu0 0.0
        %1126 = vmatpush1.msra.mxu0 0.0
        %1127 = vmatprep.subr.mxu0 0.0
        %1128 = vmatpush1.msra.mxu0 0.0
        %1129 = vmatprep.subr.mxu0 0.0
        %1130 = vmatpush1.msra.mxu0 0.0
        %1131 = vmatprep.subr.mxu0 0.0
        %1132 = vmatpush1.msra.mxu0 0.0
        %1133 = vmatprep.subr.mxu0 0.0
        %1134 = vmatpush1.msra.mxu0 0.0
        %1135 = vmatprep.subr.mxu0 0.0
        %1136 = vmatpush1.msra.mxu0 0.0
        %1137 = vmatprep.subr.mxu0 0.0
        %1138 = vmatpush1.msra.mxu0 0.0
        %1139 = vmatprep.subr.mxu0 0.0
        %1140 = vmatpush1.msra.mxu0 0.0
        %1141 = vmatprep.subr.mxu0 0.0
        %1142 = vmatpush1.msra.mxu0 0.0
        %1143 = vmatprep.subr.mxu0 0.0
        %1144 = vmatpush1.msra.mxu0 0.0
        %1145 = vmatprep.subr.mxu0 0.0
        %1146 = vmatpush1.msra.mxu0 0.0
        %1147 = vmatprep.subr.mxu0 0.0
        %1148 = vmatpush1.msra.mxu0 0.0
        %1149 = vmatprep.subr.mxu0 0.0
        %1150 = vmatpush1.msra.mxu0 0.0
        %1151 = vmatprep.subr.mxu0 0.0
        %1152 = vmatpush1.msra.mxu0 0.0
        %1153 = vmatprep.subr.mxu0 0.0
        %1154 = vmatpush1.msra.mxu0 0.0
        %1155 = vmatprep.subr.mxu0 0.0
        %1156 = vmatpush1.msra.mxu0 0.0
        %1157 = vmatprep.subr.mxu0 0.0
        %1158 = vmatpush1.msra.mxu0 0.0
        %1159 = vmatprep.mubr.f32.mxu0 0.0
        %1160 = vmatmul.mubr.f32.gmra.mrb[0].mxu0 %v367
        %v1161 = vpop.f32.mrb[0].mxu0
        %v1162 = vadd.f32 %v350, %v1161
        %v1163 = vpop.f32.mrb[0].mxu0
        %1164 = vdwg.mxu0
        %v1166 = vcombine.high %v1162, %v1162
        %v1168 = vunpack.c.l.s4 1966171168
        %v1169 = vunpack.c.0.s8 %v1168
        %v1170 = vlaneseq
        %v1171 = vshrl.u32 %v1170, 7
        %v1172 = vsub.s32 %v1169, %v1171
        %v1173 = vrot.slane %v1162, %v1172
        %v1175 = vunpack.c.l.s4 1966171168
        %v1176 = vunpack.c.0.s8 %v1175
        %v1177 = vlaneseq
        %v1178 = vshrl.u32 %v1177, 7
        %v1179 = vsub.s32 %v1176, %v1178
        %v1180 = vrot.slane %v1166, %v1179
        %v1181 = vcombine.high %v1173, %v1173
        %v1182 = vcombine.high %v1180, %v1180
        %v1184 = vunpack.c.l.s4 1966171168
        %v1185 = vunpack.c.0.s8 %v1184
        %v1186 = vlaneseq
        %v1187 = vshrl.u32 %v1186, 7
        %v1188 = vsub.s32 %v1185, %v1187
        %v1189 = vrot.slane %v1173, %v1188
        %v1191 = vunpack.c.l.s4 1966171168
        %v1192 = vunpack.c.0.s8 %v1191
        %v1193 = vlaneseq
        %v1194 = vshrl.u32 %v1193, 7
        %v1195 = vsub.s32 %v1192, %v1194
        %v1196 = vrot.slane %v1180, %v1195
        %v1198 = vunpack.c.l.s4 1966171168
        %v1199 = vunpack.c.0.s8 %v1198
        %v1200 = vlaneseq
        %v1201 = vshrl.u32 %v1200, 7
        %v1202 = vsub.s32 %v1199, %v1201
        %v1203 = vrot.slane %v1181, %v1202
        %v1205 = vunpack.c.l.s4 1966171168
        %v1206 = vunpack.c.0.s8 %v1205
        %v1207 = vlaneseq
        %v1208 = vshrl.u32 %v1207, 7
        %v1209 = vsub.s32 %v1206, %v1208
        %v1210 = vrot.slane %v1182, %v1209
        %v1211 = vcombine.high %v1189, %v1189
        %v1212 = vcombine.high %v1196, %v1196
        %v1213 = vcombine.high %v1203, %v1203
        %v1214 = vcombine.high %v1210, %v1210
        %1223 = vst.msk [vmem:[%s205 + $0x5] sm:$0x1] %vm500, %v1189
        %1224 = vst.msk [vmem:[%s205 + $0xd] sm:$0x1] %vm500, %v1203
        %1225 = vst.msk [vmem:[%s205 + $0x15] sm:$0x1] %vm500, %v1211
        %1226 = vst.msk [vmem:[%s205 + $0x1d] sm:$0x1] %vm500, %v1213
        %1227 = vst.msk [vmem:[%s205 + $0x25] sm:$0x1] %vm500, %v1196
        %1228 = vst.msk [vmem:[%s205 + $0x2d] sm:$0x1] %vm500, %v1210
        %1229 = vst.msk [vmem:[%s205 + $0x35] sm:$0x1] %vm500, %v1212
        %1230 = vst.msk [vmem:[%s205 + $0x3d] sm:$0x1] %vm500, %v1214
        %v1231 = vrot.slane %v327, 6
        %v1232 = vrot.slane %v332, 5
        %v1233 = vsel %vm357, %v1232, %v1231
        %v1234 = vrot.slane %v337, 4
        %v1235 = vsel %vm360, %v1234, %v1233
        %v1236 = vrot.slane %v342, 3
        %v1237 = vsel %vm363, %v1236, %v1235
        %v1238 = vsel %vm369, %v1237, 0
        %1240 = vmatprep.subr.mxu0 0.0
        %1241 = vmatpush1.msra.mxu0 %v1238
        %1242 = vmatprep.subr.mxu0 0.0
        %1243 = vmatpush1.msra.mxu0 0.0
        %1244 = vmatprep.subr.mxu0 0.0
        %1245 = vmatpush1.msra.mxu0 0.0
        %1246 = vmatprep.subr.mxu0 0.0
        %1247 = vmatpush1.msra.mxu0 0.0
        %1248 = vmatprep.subr.mxu0 0.0
        %1249 = vmatpush1.msra.mxu0 0.0
        %1250 = vmatprep.subr.mxu0 0.0
        %1251 = vmatpush1.msra.mxu0 0.0
        %1252 = vmatprep.subr.mxu0 0.0
        %1253 = vmatpush1.msra.mxu0 0.0
        %1254 = vmatprep.subr.mxu0 0.0
        %1255 = vmatpush1.msra.mxu0 0.0
        %1256 = vmatprep.subr.mxu0 0.0
        %1257 = vmatpush1.msra.mxu0 0.0
        %1258 = vmatprep.subr.mxu0 0.0
        %1259 = vmatpush1.msra.mxu0 0.0
        %1260 = vmatprep.subr.mxu0 0.0
        %1261 = vmatpush1.msra.mxu0 0.0
        %1262 = vmatprep.subr.mxu0 0.0
        %1263 = vmatpush1.msra.mxu0 0.0
        %1264 = vmatprep.subr.mxu0 0.0
        %1265 = vmatpush1.msra.mxu0 0.0
        %1266 = vmatprep.subr.mxu0 0.0
        %1267 = vmatpush1.msra.mxu0 0.0
        %1268 = vmatprep.subr.mxu0 0.0
        %1269 = vmatpush1.msra.mxu0 0.0
        %1270 = vmatprep.subr.mxu0 0.0
        %1271 = vmatpush1.msra.mxu0 0.0
        %1272 = vmatprep.subr.mxu0 0.0
        %1273 = vmatpush1.msra.mxu0 0.0
        %1274 = vmatprep.subr.mxu0 0.0
        %1275 = vmatpush1.msra.mxu0 0.0
        %1276 = vmatprep.subr.mxu0 0.0
        %1277 = vmatpush1.msra.mxu0 0.0
        %1278 = vmatprep.subr.mxu0 0.0
        %1279 = vmatpush1.msra.mxu0 0.0
        %1280 = vmatprep.subr.mxu0 0.0
        %1281 = vmatpush1.msra.mxu0 0.0
        %1282 = vmatprep.subr.mxu0 0.0
        %1283 = vmatpush1.msra.mxu0 0.0
        %1284 = vmatprep.subr.mxu0 0.0
        %1285 = vmatpush1.msra.mxu0 0.0
        %1286 = vmatprep.subr.mxu0 0.0
        %1287 = vmatpush1.msra.mxu0 0.0
        %1288 = vmatprep.subr.mxu0 0.0
        %1289 = vmatpush1.msra.mxu0 0.0
        %1290 = vmatprep.subr.mxu0 0.0
        %1291 = vmatpush1.msra.mxu0 0.0
        %1292 = vmatprep.subr.mxu0 0.0
        %1293 = vmatpush1.msra.mxu0 0.0
        %1294 = vmatprep.subr.mxu0 0.0
        %1295 = vmatpush1.msra.mxu0 0.0
        %1296 = vmatprep.subr.mxu0 0.0
        %1297 = vmatpush1.msra.mxu0 0.0
        %1298 = vmatprep.subr.mxu0 0.0
        %1299 = vmatpush1.msra.mxu0 0.0
        %1300 = vmatprep.subr.mxu0 0.0
        %1301 = vmatpush1.msra.mxu0 0.0
        %1302 = vmatprep.subr.mxu0 0.0
        %1303 = vmatpush1.msra.mxu0 0.0
        %1304 = vmatprep.mubr.f32.mxu0 0.0
        %1305 = vmatmul.mubr.f32.gmra.mrb[0].mxu0 %v367
        %v1306 = vpop.f32.mrb[0].mxu0
        %v1307 = vadd.f32 %v350, %v1306
        %v1308 = vpop.f32.mrb[0].mxu0
        %1309 = vdwg.mxu0
        %v1311 = vcombine.high %v1307, %v1307
        %v1313 = vunpack.c.l.s4 1966171168
        %v1314 = vunpack.c.0.s8 %v1313
        %v1315 = vlaneseq
        %v1316 = vshrl.u32 %v1315, 7
        %v1317 = vsub.s32 %v1314, %v1316
        %v1318 = vrot.slane %v1307, %v1317
        %v1320 = vunpack.c.l.s4 1966171168
        %v1321 = vunpack.c.0.s8 %v1320
        %v1322 = vlaneseq
        %v1323 = vshrl.u32 %v1322, 7
        %v1324 = vsub.s32 %v1321, %v1323
        %v1325 = vrot.slane %v1311, %v1324
        %v1326 = vcombine.high %v1318, %v1318
        %v1327 = vcombine.high %v1325, %v1325
        %v1329 = vunpack.c.l.s4 1966171168
        %v1330 = vunpack.c.0.s8 %v1329
        %v1331 = vlaneseq
        %v1332 = vshrl.u32 %v1331, 7
        %v1333 = vsub.s32 %v1330, %v1332
        %v1334 = vrot.slane %v1318, %v1333
        %v1336 = vunpack.c.l.s4 1966171168
        %v1337 = vunpack.c.0.s8 %v1336
        %v1338 = vlaneseq
        %v1339 = vshrl.u32 %v1338, 7
        %v1340 = vsub.s32 %v1337, %v1339
        %v1341 = vrot.slane %v1325, %v1340
        %v1343 = vunpack.c.l.s4 1966171168
        %v1344 = vunpack.c.0.s8 %v1343
        %v1345 = vlaneseq
        %v1346 = vshrl.u32 %v1345, 7
        %v1347 = vsub.s32 %v1344, %v1346
        %v1348 = vrot.slane %v1326, %v1347
        %v1350 = vunpack.c.l.s4 1966171168
        %v1351 = vunpack.c.0.s8 %v1350
        %v1352 = vlaneseq
        %v1353 = vshrl.u32 %v1352, 7
        %v1354 = vsub.s32 %v1351, %v1353
        %v1355 = vrot.slane %v1327, %v1354
        %v1356 = vcombine.high %v1334, %v1334
        %v1357 = vcombine.high %v1341, %v1341
        %v1358 = vcombine.high %v1348, %v1348
        %v1359 = vcombine.high %v1355, %v1355
        %1368 = vst.msk [vmem:[%s205 + $0x6] sm:$0x1] %vm500, %v1334
        %1369 = vst.msk [vmem:[%s205 + $0xe] sm:$0x1] %vm500, %v1348
        %1370 = vst.msk [vmem:[%s205 + $0x16] sm:$0x1] %vm500, %v1356
        %1371 = vst.msk [vmem:[%s205 + $0x1e] sm:$0x1] %vm500, %v1358
        %1372 = vst.msk [vmem:[%s205 + $0x26] sm:$0x1] %vm500, %v1341
        %1373 = vst.msk [vmem:[%s205 + $0x2e] sm:$0x1] %vm500, %v1355
        %1374 = vst.msk [vmem:[%s205 + $0x36] sm:$0x1] %vm500, %v1357
        %1375 = vst.msk [vmem:[%s205 + $0x3e] sm:$0x1] %vm500, %v1359
        %v1376 = vrot.slane %v327, 7
        %v1377 = vrot.slane %v332, 6
        %v1378 = vsel %vm357, %v1377, %v1376
        %v1379 = vrot.slane %v337, 5
        %v1380 = vsel %vm360, %v1379, %v1378
        %v1381 = vrot.slane %v342, 4
        %v1382 = vsel %vm363, %v1381, %v1380
        %v1383 = vsel %vm369, %v1382, 0
        %1385 = vmatprep.subr.mxu0 0.0
        %1386 = vmatpush1.msra.mxu0 %v1383
        %1387 = vmatprep.subr.mxu0 0.0
        %1388 = vmatpush1.msra.mxu0 0.0
        %1389 = vmatprep.subr.mxu0 0.0
        %1390 = vmatpush1.msra.mxu0 0.0
        %1391 = vmatprep.subr.mxu0 0.0
        %1392 = vmatpush1.msra.mxu0 0.0
        %1393 = vmatprep.subr.mxu0 0.0
        %1394 = vmatpush1.msra.mxu0 0.0
        %1395 = vmatprep.subr.mxu0 0.0
        %1396 = vmatpush1.msra.mxu0 0.0
        %1397 = vmatprep.subr.mxu0 0.0
        %1398 = vmatpush1.msra.mxu0 0.0
        %1399 = vmatprep.subr.mxu0 0.0
        %1400 = vmatpush1.msra.mxu0 0.0
        %1401 = vmatprep.subr.mxu0 0.0
        %1402 = vmatpush1.msra.mxu0 0.0
        %1403 = vmatprep.subr.mxu0 0.0
        %1404 = vmatpush1.msra.mxu0 0.0
        %1405 = vmatprep.subr.mxu0 0.0
        %1406 = vmatpush1.msra.mxu0 0.0
        %1407 = vmatprep.subr.mxu0 0.0
        %1408 = vmatpush1.msra.mxu0 0.0
        %1409 = vmatprep.subr.mxu0 0.0
        %1410 = vmatpush1.msra.mxu0 0.0
        %1411 = vmatprep.subr.mxu0 0.0
        %1412 = vmatpush1.msra.mxu0 0.0
        %1413 = vmatprep.subr.mxu0 0.0
        %1414 = vmatpush1.msra.mxu0 0.0
        %1415 = vmatprep.subr.mxu0 0.0
        %1416 = vmatpush1.msra.mxu0 0.0
        %1417 = vmatprep.subr.mxu0 0.0
        %1418 = vmatpush1.msra.mxu0 0.0
        %1419 = vmatprep.subr.mxu0 0.0
        %1420 = vmatpush1.msra.mxu0 0.0
        %1421 = vmatprep.subr.mxu0 0.0
        %1422 = vmatpush1.msra.mxu0 0.0
        %1423 = vmatprep.subr.mxu0 0.0
        %1424 = vmatpush1.msra.mxu0 0.0
        %1425 = vmatprep.subr.mxu0 0.0
        %1426 = vmatpush1.msra.mxu0 0.0
        %1427 = vmatprep.subr.mxu0 0.0
        %1428 = vmatpush1.msra.mxu0 0.0
        %1429 = vmatprep.subr.mxu0 0.0
        %1430 = vmatpush1.msra.mxu0 0.0
        %1431 = vmatprep.subr.mxu0 0.0
        %1432 = vmatpush1.msra.mxu0 0.0
        %1433 = vmatprep.subr.mxu0 0.0
        %1434 = vmatpush1.msra.mxu0 0.0
        %1435 = vmatprep.subr.mxu0 0.0
        %1436 = vmatpush1.msra.mxu0 0.0
        %1437 = vmatprep.subr.mxu0 0.0
        %1438 = vmatpush1.msra.mxu0 0.0
        %1439 = vmatprep.subr.mxu0 0.0
        %1440 = vmatpush1.msra.mxu0 0.0
        %1441 = vmatprep.subr.mxu0 0.0
        %1442 = vmatpush1.msra.mxu0 0.0
        %1443 = vmatprep.subr.mxu0 0.0
        %1444 = vmatpush1.msra.mxu0 0.0
        %1445 = vmatprep.subr.mxu0 0.0
        %1446 = vmatpush1.msra.mxu0 0.0
        %1447 = vmatprep.subr.mxu0 0.0
        %1448 = vmatpush1.msra.mxu0 0.0
        %1449 = vmatprep.mubr.f32.mxu0 0.0
        %1450 = vmatmul.mubr.f32.gmra.mrb[0].mxu0 %v367
        %v1451 = vpop.f32.mrb[0].mxu0
        %v1452 = vadd.f32 %v350, %v1451
        %v1453 = vpop.f32.mrb[0].mxu0
        %1454 = vdwg.mxu0
        %v1456 = vcombine.high %v1452, %v1452
        %v1458 = vunpack.c.l.s4 1966171168
        %v1459 = vunpack.c.0.s8 %v1458
        %v1460 = vlaneseq
        %v1461 = vshrl.u32 %v1460, 7
        %v1462 = vsub.s32 %v1459, %v1461
        %v1463 = vrot.slane %v1452, %v1462
        %v1465 = vunpack.c.l.s4 1966171168
        %v1466 = vunpack.c.0.s8 %v1465
        %v1467 = vlaneseq
        %v1468 = vshrl.u32 %v1467, 7
        %v1469 = vsub.s32 %v1466, %v1468
        %v1470 = vrot.slane %v1456, %v1469
        %v1471 = vcombine.high %v1463, %v1463
        %v1472 = vcombine.high %v1470, %v1470
        %v1474 = vunpack.c.l.s4 1966171168
        %v1475 = vunpack.c.0.s8 %v1474
        %v1476 = vlaneseq
        %v1477 = vshrl.u32 %v1476, 7
        %v1478 = vsub.s32 %v1475, %v1477
        %v1479 = vrot.slane %v1463, %v1478
        %v1481 = vunpack.c.l.s4 1966171168
        %v1482 = vunpack.c.0.s8 %v1481
        %v1483 = vlaneseq
        %v1484 = vshrl.u32 %v1483, 7
        %v1485 = vsub.s32 %v1482, %v1484
        %v1486 = vrot.slane %v1470, %v1485
        %v1488 = vunpack.c.l.s4 1966171168
        %v1489 = vunpack.c.0.s8 %v1488
        %v1490 = vlaneseq
        %v1491 = vshrl.u32 %v1490, 7
        %v1492 = vsub.s32 %v1489, %v1491
        %v1493 = vrot.slane %v1471, %v1492
        %v1495 = vunpack.c.l.s4 1966171168
        %v1496 = vunpack.c.0.s8 %v1495
        %v1497 = vlaneseq
        %v1498 = vshrl.u32 %v1497, 7
        %v1499 = vsub.s32 %v1496, %v1498
        %v1500 = vrot.slane %v1472, %v1499
        %v1501 = vcombine.high %v1479, %v1479
        %v1502 = vcombine.high %v1486, %v1486
        %v1503 = vcombine.high %v1493, %v1493
        %v1504 = vcombine.high %v1500, %v1500
        %1513 = vst.msk [vmem:[%s205 + $0x7] sm:$0x1] %vm500, %v1479
        %1514 = vst.msk [vmem:[%s205 + $0xf] sm:$0x1] %vm500, %v1493
        %1515 = vst.msk [vmem:[%s205 + $0x17] sm:$0x1] %vm500, %v1501
        %1516 = vst.msk [vmem:[%s205 + $0x1f] sm:$0x1] %vm500, %v1503
        %1517 = vst.msk [vmem:[%s205 + $0x27] sm:$0x1] %vm500, %v1486
        %1518 = vst.msk [vmem:[%s205 + $0x2f] sm:$0x1] %vm500, %v1500
        %1519 = vst.msk [vmem:[%s205 + $0x37] sm:$0x1] %vm500, %v1502
        %1520 = vst.msk [vmem:[%s205 + $0x3f] sm:$0x1] %vm500, %v1504
        %s1521 = sand.u32 %s112, 1
        %s1522 = scalar_lea.sflag [#allocation4], %s1521
        %s1523 = sand.u32 %s112, 1
        %s1524 = smul.addr %s1523, 64
        %s1525 = scalar_lea.vmem [#allocation5], %s1524
        // Predicated region
        $region37: #{tpu_custom_call.1} parent=31 // pred_check
          %p1526 = pneg %p122
        $region38: #{tpu_custom_call.1} parent=31 // pred_check_branch
          %1528 = sbr.rel (%p1526) target = $region40
        $region39: #{tpu_custom_call.1} parent=31 // pred_region
          %s1530 = ssub.s32 1024, 1024
          %1531 = vsyncadd %s1522, %s1530
          %s1532 = smul.addr %s24, 8
          %s1533 = sadd.s32 %s25, %s1532
          %s1534 = smul.addr %s1533, 128
          %s1535 = scalar_lea.hbm %s3, %s1534
          %s1536 = sshll.u32 %s1525, 4
          %s1537 = int_to_ptr.vmem [resolvable:$true] %s1536
          %1542 = dma.vmem_to_hbm [thread:$0]  %s1537, 1024, %s1535, %s1522, 128, 128, 8
        $region40: #{tpu_custom_call.1} parent=31 // pred_fallthru
          _
      $region32: #{tpu_custom_call.1} parent=5 // pred_fallthru
        _
      %p1543 = scmp.le.s32.totalorder 2, %s15
      // Predicated region
      $region41: #{tpu_custom_call.1} parent=5 // pred_check
        %p1544 = pneg %p1543
      $region42: #{tpu_custom_call.1} parent=5 // pred_check_branch
        %1546 = sbr.rel (%p1544) target = $region44
      $region43: #{tpu_custom_call.1} parent=5 // pred_region
        %s1547 = ssub.s32 %s15, 2
        // Predicated region
        $region45: #{tpu_custom_call.1} parent=43 // pred_check
          %p1548 = pneg %p128
        $region46: #{tpu_custom_call.1} parent=43 // pred_check_branch
          %1550 = sbr.rel (%p1548) target = $region48
        $region47: #{tpu_custom_call.1} parent=43 // pred_region
          %s1551 = sand.u32 %s113, 1
          %s1552 = scalar_lea.sflag [#allocation4], %s1551
          %s1553 = sand.u32 %s113, 1
          %s1554 = smul.addr %s1553, 64
          %s1555 = scalar_lea.vmem [#allocation5], %s1554
          %1556 = dma.done %s1552, 1024
        $region48: #{tpu_custom_call.1} parent=43 // pred_fallthru
          _
      $region44: #{tpu_custom_call.1} parent=5 // pred_fallthru
        _
    $region6: #{tpu_custom_call.1} parent=1 // loop_footer
      %s19 = sadd.s32 1, %s15
    $region7: #{tpu_custom_call.1} parent=1 // loop_footer_branch
      %14 = sbr.rel target = $region3
    $region8: #{tpu_custom_call.1} parent=1 // loop_exit
      _
    %1557 = vsyncpa [#allocation3], 1
    %s1558 = scalar_lea.sflag [#allocation3], 1
    %1559 = vsyncpa %s1558, 1
    %1560 = vsyncpa [#allocation4], 1
    %s1561 = scalar_lea.sflag [#allocation4], 1
    %1562 = vsyncpa %s1561, 1

</llo_original>
